<compile_context>
chip_gen: v7x
topology: tpu7x:2x2x1
jax: 0.10.0
libtpu: 0.0.40
codegen_flags: <defaults>
</compile_context>

<pallas_src>
import functools
import math

import jax
import jax.numpy as jnp
from jax.experimental import pallas as pl
from jax.experimental.pallas import tpu as pltpu


# ----------------------------------------------------------------------------
# Model definition (mirrors the PyTorch constructor logic)
# ----------------------------------------------------------------------------
INPUT_SIZE = 16
OUTPUT_SIZE = 8
LOOKBACK_COUNT = 4  # not used by forward()
MODEL_DEFINITION = [
    ("l1", (32,)),
    ("r1", ()),
    ("d1", (0.1,)),
    ("l2", (32,)),
    ("t1", ()),
    ("l3", (16,)),
    ("s1", ()),
]

# Batch-tile width in lanes (sweepable; must be a multiple of 128).
DEFAULT_BLOCK_BATCH = 4096


def build_layer_plan(input_size, output_size, model_definition):
    """Replicates NNModelEx.__init__: list of ('linear', in, out) or
    ('relu'|'tanh'|'sigmoid'|'dropout', None, None)."""
    plan = []
    p = input_size
    for k, v in model_definition:
        if k.startswith("l"):
            plan.append(("linear", p, v[0]))
            p = v[0]
        elif k.startswith("d"):
            plan.append(("dropout", None, None))  # identity in eval mode
        elif k.startswith("t"):
            plan.append(("tanh", None, None))
        elif k.startswith("s"):
            plan.append(("sigmoid", None, None))
        elif k.startswith("r"):
            plan.append(("relu", None, None))
    if p != output_size:
        plan.append(("linear", p, output_size))
    return plan


def init_params(plan, key):
    """PyTorch-like init: U(-1/sqrt(fan_in), 1/sqrt(fan_in)).
    Weights stored (out, in) f32 (PyTorch layout, matches the transposed
    lane-dense kernel); biases stored (out, 1) f32."""
    params = []
    for op, fin, fout in plan:
        if op != "linear":
            continue
        key, kw, kb = jax.random.split(key, 3)
        bound = 1.0 / math.sqrt(fin)
        w = jax.random.uniform(kw, (fout, fin), jnp.float32, -bound, bound)
        b = jax.random.uniform(kb, (fout, 1), jnp.float32, -bound, bound)
        params.append((w, b))
    return params


# ----------------------------------------------------------------------------
# Pallas kernel: fused MLP over one batch tile (features x batch layout)
# ----------------------------------------------------------------------------
def mlp_kernel(plan, x_ref, *refs):
    # refs = (w0, b0, w1, b1, ..., out_ref)
    out_ref = refs[-1]
    wb_refs = refs[:-1]

    h = x_ref[...]  # f32 (IN, TB) -- batch on lanes, features on sublanes
    li = 0
    for op, _, _ in plan:
        if op == "linear":
            w = wb_refs[2 * li][...]       # f32 (out, in), VMEM-resident
            b = wb_refs[2 * li + 1][...]   # f32 (out, 1)
            # (out, in) x (in, TB) -> (out, TB): result is 128-lane dense.
            h = jnp.dot(w, h,
                        preferred_element_type=jnp.float32,
                        precision=jax.lax.Precision.HIGHEST) + b
            li += 1
        elif op == "relu":
            h = jnp.maximum(h, 0.0)
        elif op == "tanh":
            h = jnp.tanh(h)          # EUP, f32 (safe on v5e: no bf16 EUP there)
        elif op == "sigmoid":
            h = jax.nn.sigmoid(h)
        elif op == "dropout":
            pass  # eval-mode dropout == identity
    out_ref[...] = h.astype(out_ref.dtype)   # (OUT, TB), unmasked 128-lane stores


def _round_up(n, m):
    return ((n + m - 1) // m) * m


def nn_model_ex_forward(x, params, plan, *, block_batch=DEFAULT_BLOCK_BATCH):
    """x: (batch, INPUT_SIZE) float -> (batch, OUTPUT_SIZE) float32."""
    assert block_batch % 128 == 0
    batch = x.shape[0]

    # Lane-dense layout: features on sublanes, batch on lanes.
    xt = x.astype(jnp.float32).T                      # (IN, batch)

    padded_min = _round_up(batch, 128)                # lanes must be 128-aligned
    tb = min(block_batch, padded_min)
    # v7x has 2 TensorCores: if the whole batch fits in one grid step but there
    # is enough work for two, halve the tile so both cores get a parallel step
    # (no-op / harmless on v5e & v6e which have a single TensorCore).
    if tb == padded_min and tb >= 256 and tb % 256 == 0:
        tb //= 2
    padded = _round_up(batch, tb)
    if padded != batch:
        xt = jnp.pad(xt, ((0, 0), (0, padded - batch)))

    flat_params = []
    in_specs = [pl.BlockSpec((INPUT_SIZE, tb), lambda i: (0, i))]
    for w, b in params:
        flat_params.extend([w, b])
        # Constant index_map -> Pallas keeps these blocks VMEM-resident and
        # does not re-DMA them between grid steps.
        in_specs.append(pl.BlockSpec(w.shape, lambda i: (0, 0)))
        in_specs.append(pl.BlockSpec(b.shape, lambda i: (0, 0)))

    grid = (padded // tb,)
    out_t = pl.pallas_call(
        functools.partial(mlp_kernel, plan),
        grid=grid,
        in_specs=in_specs,
        out_specs=pl.BlockSpec((OUTPUT_SIZE, tb), lambda i: (0, i)),
        out_shape=jax.ShapeDtypeStruct((OUTPUT_SIZE, padded), jnp.float32),
        compiler_params=pltpu.CompilerParams(
            # Independent batch tiles -> shard across the 2 TCs on v7x.
            dimension_semantics=("parallel",),
            # Above v5e's 16 MiB scoped default; well under v7x's 64 MiB VMEM.
            vmem_limit_bytes=32 * 1024 * 1024,
        ),
    )(xt, *flat_params)

    # Back to the module's (batch, OUT) layout; padding rows sliced off.
    return out_t[:, :batch].T


# ----------------------------------------------------------------------------
# Pure-JAX reference (same f32 math, standard batch-major layout)
# ----------------------------------------------------------------------------
def reference_forward(x, params, plan):
    h = x.astype(jnp.float32)
    li = 0
    for op, _, _ in plan:
        if op == "linear":
            w, b = params[li]            # w (out, in), b (out, 1)
            h = jnp.dot(h, w.T, precision=jax.lax.Precision.HIGHEST) + b.T
            li += 1
        elif op == "relu":
            h = jnp.maximum(h, 0.0)
        elif op == "tanh":
            h = jnp.tanh(h)
        elif op == "sigmoid":
            h = jax.nn.sigmoid(h)
        elif op == "dropout":
            pass
    return h


if __name__ == "__main__":
    plan = build_layer_plan(INPUT_SIZE, OUTPUT_SIZE, MODEL_DEFINITION)

    key = jax.random.PRNGKey(0)
    key, xkey, xkey2 = jax.random.split(key, 3)
    params = init_params(plan, key)

    # Small example input (batch=8, features=16); one grid step (tile padded
    # to the 128-lane minimum).
    batch = 8
    x = jax.random.normal(xkey, (batch, INPUT_SIZE), jnp.float32)
    out = jax.block_until_ready(nn_model_ex_forward(x, params, plan))
    ref = reference_forward(x, params, plan)
    assert out.shape == (batch, OUTPUT_SIZE)
    assert jnp.allclose(out, ref, atol=1e-3, rtol=1e-3), (
        float(jnp.max(jnp.abs(out - ref))))

    # Exercise the multi-step batch grid + tail padding (grid=3, 300 -> 384).
    batch2 = 300
    x2 = jax.random.normal(xkey2, (batch2, INPUT_SIZE), jnp.float32)
    out2 = jax.block_until_ready(
        nn_model_ex_forward(x2, params, plan, block_batch=128))
    ref2 = reference_forward(x2, params, plan)
    assert out2.shape == (batch2, OUTPUT_SIZE)
    assert jnp.allclose(out2, ref2, atol=1e-3, rtol=1e-3), (
        float(jnp.max(jnp.abs(out2 - ref2))))

    print("KERNEL_OK")
</pallas_src>

<mosaic_0001>
module attributes {stable_mosaic.version = 11 : i64} {
  func.func @mlp_kernel(%arg0: i32, %arg1: memref<16x128xf32, #tpu.memory_space<vmem>>, %arg2: memref<32x16xf32, #tpu.memory_space<vmem>>, %arg3: memref<32x1xf32, #tpu.memory_space<vmem>>, %arg4: memref<32x32xf32, #tpu.memory_space<vmem>>, %arg5: memref<32x1xf32, #tpu.memory_space<vmem>>, %arg6: memref<16x32xf32, #tpu.memory_space<vmem>>, %arg7: memref<16x1xf32, #tpu.memory_space<vmem>>, %arg8: memref<8x16xf32, #tpu.memory_space<vmem>>, %arg9: memref<8x1xf32, #tpu.memory_space<vmem>>, %arg10: memref<8x128xf32, #tpu.memory_space<vmem>>) attributes {dimension_semantics = [#tpu.dimension_semantics<parallel>], iteration_bounds = array<i64: 1>, scalar_prefetch = 0 : i64, scratch_operands = 0 : i64, tpu.core_type = #tpu.core_type<tc>, window_params = [{transform_indices = @transform_0, window_bounds = array<i64: 16, 128>}, {pipeline_mode = #tpu.pipeline_mode<synchronous>, transform_indices = @transform_1, window_bounds = array<i64: 32, 16>}, {pipeline_mode = #tpu.pipeline_mode<synchronous>, transform_indices = @transform_2, window_bounds = array<i64: 32, 1>}, {pipeline_mode = #tpu.pipeline_mode<synchronous>, transform_indices = @transform_3, window_bounds = array<i64: 32, 32>}, {pipeline_mode = #tpu.pipeline_mode<synchronous>, transform_indices = @transform_4, window_bounds = array<i64: 32, 1>}, {pipeline_mode = #tpu.pipeline_mode<synchronous>, transform_indices = @transform_5, window_bounds = array<i64: 16, 32>}, {pipeline_mode = #tpu.pipeline_mode<synchronous>, transform_indices = @transform_6, window_bounds = array<i64: 16, 1>}, {pipeline_mode = #tpu.pipeline_mode<synchronous>, transform_indices = @transform_7, window_bounds = array<i64: 8, 16>}, {pipeline_mode = #tpu.pipeline_mode<synchronous>, transform_indices = @transform_8, window_bounds = array<i64: 8, 1>}, {transform_indices = @transform_9, window_bounds = array<i64: 8, 128>}]} {
    %c0 = arith.constant 0 : index
    %c0_0 = arith.constant 0 : index
    %0 = vector.load %arg1[%c0, %c0_0] : memref<16x128xf32, #tpu.memory_space<vmem>>, vector<16x128xf32>
    %c0_1 = arith.constant 0 : index
    %c0_2 = arith.constant 0 : index
    %1 = vector.load %arg2[%c0_1, %c0_2] : memref<32x16xf32, #tpu.memory_space<vmem>>, vector<32x16xf32>
    %c0_3 = arith.constant 0 : index
    %c0_4 = arith.constant 0 : index
    %2 = vector.load %arg3[%c0_3, %c0_4] : memref<32x1xf32, #tpu.memory_space<vmem>>, vector<32x1xf32>
    %cst = arith.constant dense<0.000000e+00> : vector<32x128xf32>
    %3 = tpu.matmul %1, %0, %cst {dimension_numbers = #tpu.dot_dimension_numbers<[1], [0], [0], [1], [0, 0, 1, 1], [], []>, precision = #tpu.contract_precision<fp32>} : vector<32x16xf32>, vector<16x128xf32>, vector<32x128xf32> -> vector<32x128xf32>
    %4 = vector.broadcast %2 : vector<32x1xf32> to vector<32x128xf32>
    %5 = arith.addf %3, %4 : vector<32x128xf32>
    %cst_5 = arith.constant 0.000000e+00 : f32
    %6 = vector.broadcast %cst_5 : f32 to vector<32x128xf32>
    %7 = arith.maximumf %5, %6 : vector<32x128xf32>
    %c0_6 = arith.constant 0 : index
    %c0_7 = arith.constant 0 : index
    %8 = vector.load %arg4[%c0_6, %c0_7] : memref<32x32xf32, #tpu.memory_space<vmem>>, vector<32x32xf32>
    %c0_8 = arith.constant 0 : index
    %c0_9 = arith.constant 0 : index
    %9 = vector.load %arg5[%c0_8, %c0_9] : memref<32x1xf32, #tpu.memory_space<vmem>>, vector<32x1xf32>
    %cst_10 = arith.constant dense<0.000000e+00> : vector<32x128xf32>
    %10 = tpu.matmul %8, %7, %cst_10 {dimension_numbers = #tpu.dot_dimension_numbers<[1], [0], [0], [1], [0, 0, 1, 1], [], []>, precision = #tpu.contract_precision<fp32>} : vector<32x32xf32>, vector<32x128xf32>, vector<32x128xf32> -> vector<32x128xf32>
    %11 = vector.broadcast %9 : vector<32x1xf32> to vector<32x128xf32>
    %12 = arith.addf %10, %11 : vector<32x128xf32>
    %13 = math.tanh %12 : vector<32x128xf32>
    %c0_11 = arith.constant 0 : index
    %c0_12 = arith.constant 0 : index
    %14 = vector.load %arg6[%c0_11, %c0_12] : memref<16x32xf32, #tpu.memory_space<vmem>>, vector<16x32xf32>
    %c0_13 = arith.constant 0 : index
    %c0_14 = arith.constant 0 : index
    %15 = vector.load %arg7[%c0_13, %c0_14] : memref<16x1xf32, #tpu.memory_space<vmem>>, vector<16x1xf32>
    %cst_15 = arith.constant dense<0.000000e+00> : vector<16x128xf32>
    %16 = tpu.matmul %14, %13, %cst_15 {dimension_numbers = #tpu.dot_dimension_numbers<[1], [0], [0], [1], [0, 0, 1, 1], [], []>, precision = #tpu.contract_precision<fp32>} : vector<16x32xf32>, vector<32x128xf32>, vector<16x128xf32> -> vector<16x128xf32>
    %17 = vector.broadcast %15 : vector<16x1xf32> to vector<16x128xf32>
    %18 = arith.addf %16, %17 : vector<16x128xf32>
    %19 = arith.negf %18 : vector<16x128xf32>
    %20 = math.exp %19 : vector<16x128xf32>
    %cst_16 = arith.constant 1.000000e+00 : f32
    %21 = vector.broadcast %cst_16 : f32 to vector<16x128xf32>
    %22 = arith.addf %21, %20 : vector<16x128xf32>
    %23 = arith.divf %21, %22 : vector<16x128xf32>
    %c0_17 = arith.constant 0 : index
    %c0_18 = arith.constant 0 : index
    %24 = vector.load %arg8[%c0_17, %c0_18] : memref<8x16xf32, #tpu.memory_space<vmem>>, vector<8x16xf32>
    %c0_19 = arith.constant 0 : index
    %c0_20 = arith.constant 0 : index
    %25 = vector.load %arg9[%c0_19, %c0_20] : memref<8x1xf32, #tpu.memory_space<vmem>>, vector<8x1xf32>
    %cst_21 = arith.constant dense<0.000000e+00> : vector<8x128xf32>
    %26 = tpu.matmul %24, %23, %cst_21 {dimension_numbers = #tpu.dot_dimension_numbers<[1], [0], [0], [1], [0, 0, 1, 1], [], []>, precision = #tpu.contract_precision<fp32>} : vector<8x16xf32>, vector<16x128xf32>, vector<8x128xf32> -> vector<8x128xf32>
    %27 = vector.broadcast %25 : vector<8x1xf32> to vector<8x128xf32>
    %28 = arith.addf %26, %27 : vector<8x128xf32>
    %c0_22 = arith.constant 0 : index
    %c0_23 = arith.constant 0 : index
    %29 = vector.load %arg10[%c0_22, %c0_23] : memref<8x128xf32, #tpu.memory_space<vmem>>, vector<8x128xf32>
    tpu.vector_store %arg10[%c0_22, %c0_23], %28 {strides = array<i32>} : memref<8x128xf32, #tpu.memory_space<vmem>>, vector<8x128xf32>,
    return
  }
  func.func @transform_0(%arg0: i32) -> (i32, i32) {
    %c0_i32 = arith.constant 0 : i32
    %c0_i32_0 = arith.constant 0 : i32
    return %c0_i32, %arg0 : i32, i32
  }
  func.func @transform_1(%arg0: i32) -> (i32, i32) {
    %c0_i32 = arith.constant 0 : i32
    %c0_i32_0 = arith.constant 0 : i32
    %c0_i32_1 = arith.constant 0 : i32
    return %c0_i32, %c0_i32_0 : i32, i32
  }
  func.func @transform_2(%arg0: i32) -> (i32, i32) {
    %c0_i32 = arith.constant 0 : i32
    %c0_i32_0 = arith.constant 0 : i32
    %c0_i32_1 = arith.constant 0 : i32
    return %c0_i32, %c0_i32_0 : i32, i32
  }
  func.func @transform_3(%arg0: i32) -> (i32, i32) {
    %c0_i32 = arith.constant 0 : i32
    %c0_i32_0 = arith.constant 0 : i32
    %c0_i32_1 = arith.constant 0 : i32
    return %c0_i32, %c0_i32_0 : i32, i32
  }
  func.func @transform_4(%arg0: i32) -> (i32, i32) {
    %c0_i32 = arith.constant 0 : i32
    %c0_i32_0 = arith.constant 0 : i32
    %c0_i32_1 = arith.constant 0 : i32
    return %c0_i32, %c0_i32_0 : i32, i32
  }
  func.func @transform_5(%arg0: i32) -> (i32, i32) {
    %c0_i32 = arith.constant 0 : i32
    %c0_i32_0 = arith.constant 0 : i32
    %c0_i32_1 = arith.constant 0 : i32
    return %c0_i32, %c0_i32_0 : i32, i32
  }
  func.func @transform_6(%arg0: i32) -> (i32, i32) {
    %c0_i32 = arith.constant 0 : i32
    %c0_i32_0 = arith.constant 0 : i32
    %c0_i32_1 = arith.constant 0 : i32
    return %c0_i32, %c0_i32_0 : i32, i32
  }
  func.func @transform_7(%arg0: i32) -> (i32, i32) {
    %c0_i32 = arith.constant 0 : i32
    %c0_i32_0 = arith.constant 0 : i32
    %c0_i32_1 = arith.constant 0 : i32
    return %c0_i32, %c0_i32_0 : i32, i32
  }
  func.func @transform_8(%arg0: i32) -> (i32, i32) {
    %c0_i32 = arith.constant 0 : i32
    %c0_i32_0 = arith.constant 0 : i32
    %c0_i32_1 = arith.constant 0 : i32
    return %c0_i32, %c0_i32_0 : i32, i32
  }
  func.func @transform_9(%arg0: i32) -> (i32, i32) {
    %c0_i32 = arith.constant 0 : i32
    %c0_i32_0 = arith.constant 0 : i32
    return %c0_i32, %arg0 : i32, i32
  }
}

</mosaic_0001>

<llo_original>
// kernel: tpu_custom_call.1
$region0: #{tpu_custom_call.1}
  #allocation0 [shape = 'u32[]', space=smem, size = 0x4, offset = 0x4, fixed_abs, tag = 'smem constant byte address 0x4 - core index']
  #allocation1 [shape = 'u32[144,128]{1,0:T(1,128)}', space=vmem, size = 0x12000, scoped, tag = 'internal scratch']
  %s0 = inlined_call_operand.vmem [shape: f32[16,128], index: 0, kind: input, shape index: {}]
  %s1 = inlined_call_operand.vmem [shape: f32[32,16], index: 1, kind: input, shape index: {}]
  %s2 = inlined_call_operand.vmem [shape: f32[32,1], index: 2, kind: input, shape index: {}]
  %s3 = inlined_call_operand.vmem [shape: f32[32,32], index: 3, kind: input, shape index: {}]
  %s4 = inlined_call_operand.vmem [shape: f32[32,1], index: 4, kind: input, shape index: {}]
  %s5 = inlined_call_operand.vmem [shape: f32[16,32], index: 5, kind: input, shape index: {}]
  %s6 = inlined_call_operand.vmem [shape: f32[16,1], index: 6, kind: input, shape index: {}]
  %s7 = inlined_call_operand.vmem [shape: f32[8,16], index: 7, kind: input, shape index: {}]
  %s8 = inlined_call_operand.vmem [shape: f32[8,1], index: 8, kind: input, shape index: {}]
  %s9 = inlined_call_operand.hbm [shape: f32[8,128], index: 9, kind: output, shape index: {}]
  %s10 = sld [smem:[#allocation0]]
  $region46: #{tpu_custom_call.1} parent=0
    _
  %s12 = ssub.s32 1, %s10
  %s13 = scalar_select 0, %s12, %s10
  $region1: #{tpu_custom_call.1} parent=0
    #allocation2 [shape = 'u8[4096]{0}', space=vmem, size = 0x1000, scoped, tag = 'output window, operand 0, single buffered']
    #allocation3 [shape = 's32[1]{0}', space=sflag, size = 0x4, scoped, tag = 'scoped memory for tpu_custom_call.1']
    %14 = vsyncpa [#allocation3], 0
    // Predicated region
    $region2: #{tpu_custom_call.1} parent=1 // pred_check
      _
    $region3: #{tpu_custom_call.1} parent=1 // pred_check_branch
      %16 = sbr.rel (0) target = $region5
    $region4: #{tpu_custom_call.1} parent=1 // pred_region
      _
    $region5: #{tpu_custom_call.1} parent=1 // pred_fallthru
      _
    // Predicated region
    $region6: #{tpu_custom_call.1} parent=1 // pred_check
      _
    $region7: #{tpu_custom_call.1} parent=1 // pred_check_branch
      %18 = sbr.rel (0) target = $region9
    $region8: #{tpu_custom_call.1} parent=1 // pred_region
      _
    $region9: #{tpu_custom_call.1} parent=1 // pred_fallthru
      _
    // Predicated region
    $region10: #{tpu_custom_call.1} parent=1 // pred_check
      _
    $region11: #{tpu_custom_call.1} parent=1 // pred_check_branch
      %20 = sbr.rel (0) target = $region13
    $region12: #{tpu_custom_call.1} parent=1 // pred_region
      _
    $region13: #{tpu_custom_call.1} parent=1 // pred_fallthru
      _
    // Predicated region
    $region14: #{tpu_custom_call.1} parent=1 // pred_check
      _
    $region15: #{tpu_custom_call.1} parent=1 // pred_check_branch
      %22 = sbr.rel (0) target = $region17
    $region16: #{tpu_custom_call.1} parent=1 // pred_region
      _
    $region17: #{tpu_custom_call.1} parent=1 // pred_fallthru
      _
    // Predicated region
    $region18: #{tpu_custom_call.1} parent=1 // pred_check
      _
    $region19: #{tpu_custom_call.1} parent=1 // pred_check_branch
      %24 = sbr.rel (0) target = $region21
    $region20: #{tpu_custom_call.1} parent=1 // pred_region
      _
    $region21: #{tpu_custom_call.1} parent=1 // pred_fallthru
      _
    // Predicated region
    $region22: #{tpu_custom_call.1} parent=1 // pred_check
      _
    $region23: #{tpu_custom_call.1} parent=1 // pred_check_branch
      %26 = sbr.rel (0) target = $region25
    $region24: #{tpu_custom_call.1} parent=1 // pred_region
      _
    $region25: #{tpu_custom_call.1} parent=1 // pred_fallthru
      _
    // Predicated region
    $region26: #{tpu_custom_call.1} parent=1 // pred_check
      _
    $region27: #{tpu_custom_call.1} parent=1 // pred_check_branch
      %28 = sbr.rel (0) target = $region29
    $region28: #{tpu_custom_call.1} parent=1 // pred_region
      _
    $region29: #{tpu_custom_call.1} parent=1 // pred_fallthru
      _
    // Predicated region
    $region30: #{tpu_custom_call.1} parent=1 // pred_check
      _
    $region31: #{tpu_custom_call.1} parent=1 // pred_check_branch
      %30 = sbr.rel (0) target = $region33
    $region32: #{tpu_custom_call.1} parent=1 // pred_region
      _
    $region33: #{tpu_custom_call.1} parent=1 // pred_fallthru
      _
    // Predicated region
    $region34: #{tpu_custom_call.1} parent=1 // pred_check
      _
    $region35: #{tpu_custom_call.1} parent=1 // pred_check_branch
      %32 = sbr.rel (0) target = $region37
    $region36: #{tpu_custom_call.1} parent=1 // pred_region
      _
    $region37: #{tpu_custom_call.1} parent=1 // pred_fallthru
      _
    %v33 = vld [vmem:[%s0] sm:$0xff]
    %v34 = vld [vmem:[%s0 + $0x8] sm:$0xff]
    %v35 = vld [vmem:[%s1] sm:$0xff]
    %v36 = vld [vmem:[%s1 + $0x8] sm:$0xff]
    %v37 = vld [vmem:[%s1 + $0x10] sm:$0xff]
    %v38 = vld [vmem:[%s1 + $0x18] sm:$0xff]
    %v39 = vld [vmem:[%s2] sm:$0xff]
    %v40 = vld [vmem:[%s2 + $0x8] sm:$0xff]
    %v41 = vld [vmem:[%s2 + $0x10] sm:$0xff]
    %v42 = vld [vmem:[%s2 + $0x18] sm:$0xff]
    %44 = vset.pattern.permute.xlu0 0
    %45 = vperm.xlu0 %44, %v39
    %v46 = vpop.permute.xlu0 %45
    %49 = vset.pattern.permute.xlu0 0
    %50 = vperm.xlu0 %49, %v40
    %v51 = vpop.permute.xlu0 %50
    %54 = vset.pattern.permute.xlu0 0
    %55 = vperm.xlu0 %54, %v41
    %v56 = vpop.permute.xlu0 %55
    %59 = vset.pattern.permute.xlu0 0
    %60 = vperm.xlu0 %59, %v42
    %v61 = vpop.permute.xlu0 %60
    %vm63 = vcmask 130048
    %v65 = vsel %vm63, %v35, 0
    %v68 = vsel %vm63, %v36, 0
    %v71 = vsel %vm63, %v37, 0
    %v74 = vsel %vm63, %v38, 0
    %76 = vmatprep.subr.mxu0 0.0
    %v77 = vand.u32 %v33, 4294901760
    %78 = vmatpush1.msra.mxu0 %v77
    %79 = vmatprep.subr.mxu0 0.0
    %v80 = vand.u32 %v34, 4294901760
    %81 = vmatpush1.msra.mxu0 %v80
    %82 = vmatprep.subr.mxu0 0.0
    %83 = vmatpush1.msra.mxu0 0.0
    %84 = vmatprep.subr.mxu0 0.0
    %85 = vmatpush1.msra.mxu0 0.0
    %86 = vmatprep.subr.mxu0 0.0
    %87 = vmatpush1.msra.mxu0 0.0
    %88 = vmatprep.subr.mxu0 0.0
    %89 = vmatpush1.msra.mxu0 0.0
    %90 = vmatprep.subr.mxu0 0.0
    %91 = vmatpush1.msra.mxu0 0.0
    %92 = vmatprep.subr.mxu0 0.0
    %93 = vmatpush1.msra.mxu0 0.0
    %94 = vmatprep.subr.mxu0 0.0
    %95 = vmatpush1.msra.mxu0 0.0
    %96 = vmatprep.subr.mxu0 0.0
    %97 = vmatpush1.msra.mxu0 0.0
    %98 = vmatprep.subr.mxu0 0.0
    %99 = vmatpush1.msra.mxu0 0.0
    %100 = vmatprep.subr.mxu0 0.0
    %101 = vmatpush1.msra.mxu0 0.0
    %102 = vmatprep.subr.mxu0 0.0
    %103 = vmatpush1.msra.mxu0 0.0
    %104 = vmatprep.subr.mxu0 0.0
    %105 = vmatpush1.msra.mxu0 0.0
    %106 = vmatprep.subr.mxu0 0.0
    %107 = vmatpush1.msra.mxu0 0.0
    %108 = vmatprep.subr.mxu0 0.0
    %109 = vmatpush1.msra.mxu0 0.0
    %110 = vmatprep.subr.mxu0 0.0
    %111 = vmatpush1.msra.mxu0 0.0
    %112 = vmatprep.subr.mxu0 0.0
    %113 = vmatpush1.msra.mxu0 0.0
    %114 = vmatprep.subr.mxu0 0.0
    %115 = vmatpush1.msra.mxu0 0.0
    %116 = vmatprep.subr.mxu0 0.0
    %117 = vmatpush1.msra.mxu0 0.0
    %118 = vmatprep.subr.mxu0 0.0
    %119 = vmatpush1.msra.mxu0 0.0
    %120 = vmatprep.subr.mxu0 0.0
    %121 = vmatpush1.msra.mxu0 0.0
    %122 = vmatprep.subr.mxu0 0.0
    %123 = vmatpush1.msra.mxu0 0.0
    %124 = vmatprep.subr.mxu0 0.0
    %125 = vmatpush1.msra.mxu0 0.0
    %126 = vmatprep.subr.mxu0 0.0
    %127 = vmatpush1.msra.mxu0 0.0
    %128 = vmatprep.subr.mxu0 0.0
    %129 = vmatpush1.msra.mxu0 0.0
    %130 = vmatprep.subr.mxu0 0.0
    %131 = vmatpush1.msra.mxu0 0.0
    %132 = vmatprep.subr.mxu0 0.0
    %133 = vmatpush1.msra.mxu0 0.0
    %134 = vmatprep.subr.mxu0 0.0
    %135 = vmatpush1.msra.mxu0 0.0
    %136 = vmatprep.subr.mxu0 0.0
    %137 = vmatpush1.msra.mxu0 0.0
    %138 = vmatprep.subr.mxu0 0.0
    %139 = vmatpush1.msra.mxu0 0.0
    %140 = vmatprep.subr.mxu0 0.0
    %141 = vmatpush1.msra.mxu0 0.0
    %142 = vmatprep.mubr.f32.mxu0 0.0
    %v143 = vand.u32 %v65, 4294901760
    %v144 = vsub.f32 %v65, %v143
    %v145 = vand.u32 %v144, 4294901760
    %v146 = vsub.f32 %v144, %v145
    %v147 = vand.u32 %v146, 4294901760
    %148 = vmatmul.mubr.f32.gmra.mrb[0].mxu0 %v147
    %v149 = vpop.f32.mrb[0].mxu0
    %v150 = vadd.f32 %v46, %v149
    %v151 = vpop.f32.mrb[0].mxu0
    %152 = vmatprep.mubr.f32.mxu0 0.0
    %v153 = vand.u32 %v68, 4294901760
    %v154 = vsub.f32 %v68, %v153
    %v155 = vand.u32 %v154, 4294901760
    %v156 = vsub.f32 %v154, %v155
    %v157 = vand.u32 %v156, 4294901760
    %158 = vmatmul.mubr.f32.gmra.mrb[0].mxu0 %v157
    %v159 = vpop.f32.mrb[0].mxu0
    %v160 = vadd.f32 %v51, %v159
    %v161 = vpop.f32.mrb[0].mxu0
    %162 = vmatprep.mubr.f32.mxu0 0.0
    %v163 = vand.u32 %v71, 4294901760
    %v164 = vsub.f32 %v71, %v163
    %v165 = vand.u32 %v164, 4294901760
    %v166 = vsub.f32 %v164, %v165
    %v167 = vand.u32 %v166, 4294901760
    %168 = vmatmul.mubr.f32.gmra.mrb[0].mxu0 %v167
    %v169 = vpop.f32.mrb[0].mxu0
    %v170 = vadd.f32 %v56, %v169
    %v171 = vpop.f32.mrb[0].mxu0
    %172 = vmatprep.mubr.f32.mxu0 0.0
    %v173 = vand.u32 %v74, 4294901760
    %v174 = vsub.f32 %v74, %v173
    %v175 = vand.u32 %v174, 4294901760
    %v176 = vsub.f32 %v174, %v175
    %v177 = vand.u32 %v176, 4294901760
    %178 = vmatmul.mubr.f32.gmra.mrb[0].mxu0 %v177
    %v179 = vpop.f32.mrb[0].mxu0
    %v180 = vadd.f32 %v61, %v179
    %v181 = vpop.f32.mrb[0].mxu0
    %182 = vdwg.mxu0
    %183 = vmatprep.subr.mxu0 0.0
    %v184 = vand.u32 %v33, 4294901760
    %v185 = vsub.f32 %v33, %v184
    %v186 = vand.u32 %v185, 4294901760
    %v187 = vsub.f32 %v185, %v186
    %v188 = vand.u32 %v187, 4294901760
    %189 = vmatpush1.msra.mxu0 %v188
    %190 = vmatprep.subr.mxu0 0.0
    %v191 = vand.u32 %v34, 4294901760
    %v192 = vsub.f32 %v34, %v191
    %v193 = vand.u32 %v192, 4294901760
    %v194 = vsub.f32 %v192, %v193
    %v195 = vand.u32 %v194, 4294901760
    %196 = vmatpush1.msra.mxu0 %v195
    %197 = vmatprep.subr.mxu0 0.0
    %198 = vmatpush1.msra.mxu0 0.0
    %199 = vmatprep.subr.mxu0 0.0
    %200 = vmatpush1.msra.mxu0 0.0
    %201 = vmatprep.subr.mxu0 0.0
    %202 = vmatpush1.msra.mxu0 0.0
    %203 = vmatprep.subr.mxu0 0.0
    %204 = vmatpush1.msra.mxu0 0.0
    %205 = vmatprep.subr.mxu0 0.0
    %206 = vmatpush1.msra.mxu0 0.0
    %207 = vmatprep.subr.mxu0 0.0
    %208 = vmatpush1.msra.mxu0 0.0
    %209 = vmatprep.subr.mxu0 0.0
    %210 = vmatpush1.msra.mxu0 0.0
    %211 = vmatprep.subr.mxu0 0.0
    %212 = vmatpush1.msra.mxu0 0.0
    %213 = vmatprep.subr.mxu0 0.0
    %214 = vmatpush1.msra.mxu0 0.0
    %215 = vmatprep.subr.mxu0 0.0
    %216 = vmatpush1.msra.mxu0 0.0
    %217 = vmatprep.subr.mxu0 0.0
    %218 = vmatpush1.msra.mxu0 0.0
    %219 = vmatprep.subr.mxu0 0.0
    %220 = vmatpush1.msra.mxu0 0.0
    %221 = vmatprep.subr.mxu0 0.0
    %222 = vmatpush1.msra.mxu0 0.0
    %223 = vmatprep.subr.mxu0 0.0
    %224 = vmatpush1.msra.mxu0 0.0
    %225 = vmatprep.subr.mxu0 0.0
    %226 = vmatpush1.msra.mxu0 0.0
    %227 = vmatprep.subr.mxu0 0.0
    %228 = vmatpush1.msra.mxu0 0.0
    %229 = vmatprep.subr.mxu0 0.0
    %230 = vmatpush1.msra.mxu0 0.0
    %231 = vmatprep.subr.mxu0 0.0
    %232 = vmatpush1.msra.mxu0 0.0
    %233 = vmatprep.subr.mxu0 0.0
    %234 = vmatpush1.msra.mxu0 0.0
    %235 = vmatprep.subr.mxu0 0.0
    %236 = vmatpush1.msra.mxu0 0.0
    %237 = vmatprep.subr.mxu0 0.0
    %238 = vmatpush1.msra.mxu0 0.0
    %239 = vmatprep.subr.mxu0 0.0
    %240 = vmatpush1.msra.mxu0 0.0
    %241 = vmatprep.subr.mxu0 0.0
    %242 = vmatpush1.msra.mxu0 0.0
    %243 = vmatprep.subr.mxu0 0.0
    %244 = vmatpush1.msra.mxu0 0.0
    %245 = vmatprep.subr.mxu0 0.0
    %246 = vmatpush1.msra.mxu0 0.0
    %247 = vmatprep.subr.mxu0 0.0
    %248 = vmatpush1.msra.mxu0 0.0
    %249 = vmatprep.subr.mxu0 0.0
    %250 = vmatpush1.msra.mxu0 0.0
    %251 = vmatprep.subr.mxu0 0.0
    %252 = vmatpush1.msra.mxu0 0.0
    %253 = vmatprep.subr.mxu0 0.0
    %254 = vmatpush1.msra.mxu0 0.0
    %255 = vmatprep.subr.mxu0 0.0
    %256 = vmatpush1.msra.mxu0 0.0
    %257 = vmatprep.mubr.f32.mxu0 0.0
    %v258 = vand.u32 %v65, 4294901760
    %259 = vmatmul.mubr.f32.gmra.mrb[0].mxu0 %v258
    %v260 = vpop.f32.mrb[0].mxu0
    %v261 = vadd.f32 %v150, %v260
    %v262 = vpop.f32.mrb[0].mxu0
    %263 = vmatprep.mubr.f32.mxu0 0.0
    %v264 = vand.u32 %v68, 4294901760
    %265 = vmatmul.mubr.f32.gmra.mrb[0].mxu0 %v264
    %v266 = vpop.f32.mrb[0].mxu0
    %v267 = vadd.f32 %v160, %v266
    %v268 = vpop.f32.mrb[0].mxu0
    %269 = vmatprep.mubr.f32.mxu0 0.0
    %v270 = vand.u32 %v71, 4294901760
    %271 = vmatmul.mubr.f32.gmra.mrb[0].mxu0 %v270
    %v272 = vpop.f32.mrb[0].mxu0
    %v273 = vadd.f32 %v170, %v272
    %v274 = vpop.f32.mrb[0].mxu0
    %275 = vmatprep.mubr.f32.mxu0 0.0
    %v276 = vand.u32 %v74, 4294901760
    %277 = vmatmul.mubr.f32.gmra.mrb[0].mxu0 %v276
    %v278 = vpop.f32.mrb[0].mxu0
    %v279 = vadd.f32 %v180, %v278
    %v280 = vpop.f32.mrb[0].mxu0
    %281 = vdwg.mxu0
    %282 = vmatprep.subr.mxu0 0.0
    %v283 = vand.u32 %v33, 4294901760
    %v284 = vsub.f32 %v33, %v283
    %285 = vmatpush1.msra.mxu0 %v284
    %286 = vmatprep.subr.mxu0 0.0
    %v287 = vand.u32 %v34, 4294901760
    %v288 = vsub.f32 %v34, %v287
    %289 = vmatpush1.msra.mxu0 %v288
    %290 = vmatprep.subr.mxu0 0.0
    %291 = vmatpush1.msra.mxu0 0.0
    %292 = vmatprep.subr.mxu0 0.0
    %293 = vmatpush1.msra.mxu0 0.0
    %294 = vmatprep.subr.mxu0 0.0
    %295 = vmatpush1.msra.mxu0 0.0
    %296 = vmatprep.subr.mxu0 0.0
    %297 = vmatpush1.msra.mxu0 0.0
    %298 = vmatprep.subr.mxu0 0.0
    %299 = vmatpush1.msra.mxu0 0.0
    %300 = vmatprep.subr.mxu0 0.0
    %301 = vmatpush1.msra.mxu0 0.0
    %302 = vmatprep.subr.mxu0 0.0
    %303 = vmatpush1.msra.mxu0 0.0
    %304 = vmatprep.subr.mxu0 0.0
    %305 = vmatpush1.msra.mxu0 0.0
    %306 = vmatprep.subr.mxu0 0.0
    %307 = vmatpush1.msra.mxu0 0.0
    %308 = vmatprep.subr.mxu0 0.0
    %309 = vmatpush1.msra.mxu0 0.0
    %310 = vmatprep.subr.mxu0 0.0
    %311 = vmatpush1.msra.mxu0 0.0
    %312 = vmatprep.subr.mxu0 0.0
    %313 = vmatpush1.msra.mxu0 0.0
    %314 = vmatprep.subr.mxu0 0.0
    %315 = vmatpush1.msra.mxu0 0.0
    %316 = vmatprep.subr.mxu0 0.0
    %317 = vmatpush1.msra.mxu0 0.0
    %318 = vmatprep.subr.mxu0 0.0
    %319 = vmatpush1.msra.mxu0 0.0
    %320 = vmatprep.subr.mxu0 0.0
    %321 = vmatpush1.msra.mxu0 0.0
    %322 = vmatprep.subr.mxu0 0.0
    %323 = vmatpush1.msra.mxu0 0.0
    %324 = vmatprep.subr.mxu0 0.0
    %325 = vmatpush1.msra.mxu0 0.0
    %326 = vmatprep.subr.mxu0 0.0
    %327 = vmatpush1.msra.mxu0 0.0
    %328 = vmatprep.subr.mxu0 0.0
    %329 = vmatpush1.msra.mxu0 0.0
    %330 = vmatprep.subr.mxu0 0.0
    %331 = vmatpush1.msra.mxu0 0.0
    %332 = vmatprep.subr.mxu0 0.0
    %333 = vmatpush1.msra.mxu0 0.0
    %334 = vmatprep.subr.mxu0 0.0
    %335 = vmatpush1.msra.mxu0 0.0
    %336 = vmatprep.subr.mxu0 0.0
    %337 = vmatpush1.msra.mxu0 0.0
    %338 = vmatprep.subr.mxu0 0.0
    %339 = vmatpush1.msra.mxu0 0.0
    %340 = vmatprep.subr.mxu0 0.0
    %341 = vmatpush1.msra.mxu0 0.0
    %342 = vmatprep.subr.mxu0 0.0
    %343 = vmatpush1.msra.mxu0 0.0
    %344 = vmatprep.subr.mxu0 0.0
    %345 = vmatpush1.msra.mxu0 0.0
    %346 = vmatprep.subr.mxu0 0.0
    %347 = vmatpush1.msra.mxu0 0.0
    %348 = vmatprep.subr.mxu0 0.0
    %349 = vmatpush1.msra.mxu0 0.0
    %350 = vmatprep.mubr.f32.mxu0 0.0
    %v351 = vand.u32 %v65, 4294901760
    %v352 = vsub.f32 %v65, %v351
    %353 = vmatmul.mubr.f32.gmra.mrb[0].mxu0 %v352
    %v354 = vpop.f32.mrb[0].mxu0
    %v355 = vadd.f32 %v261, %v354
    %v356 = vpop.f32.mrb[0].mxu0
    %357 = vmatprep.mubr.f32.mxu0 0.0
    %v358 = vand.u32 %v68, 4294901760
    %v359 = vsub.f32 %v68, %v358
    %360 = vmatmul.mubr.f32.gmra.mrb[0].mxu0 %v359
    %v361 = vpop.f32.mrb[0].mxu0
    %v362 = vadd.f32 %v267, %v361
    %v363 = vpop.f32.mrb[0].mxu0
    %364 = vmatprep.mubr.f32.mxu0 0.0
    %v365 = vand.u32 %v71, 4294901760
    %v366 = vsub.f32 %v71, %v365
    %367 = vmatmul.mubr.f32.gmra.mrb[0].mxu0 %v366
    %v368 = vpop.f32.mrb[0].mxu0
    %v369 = vadd.f32 %v273, %v368
    %v370 = vpop.f32.mrb[0].mxu0
    %371 = vmatprep.mubr.f32.mxu0 0.0
    %v372 = vand.u32 %v74, 4294901760
    %v373 = vsub.f32 %v74, %v372
    %374 = vmatmul.mubr.f32.gmra.mrb[0].mxu0 %v373
    %v375 = vpop.f32.mrb[0].mxu0
    %v376 = vadd.f32 %v279, %v375
    %v377 = vpop.f32.mrb[0].mxu0
    %378 = vdwg.mxu0
    %379 = vmatprep.subr.mxu0 0.0
    %v380 = vand.u32 %v33, 4294901760
    %381 = vmatpush1.msra.mxu0 %v380
    %382 = vmatprep.subr.mxu0 0.0
    %v383 = vand.u32 %v34, 4294901760
    %384 = vmatpush1.msra.mxu0 %v383
    %385 = vmatprep.subr.mxu0 0.0
    %386 = vmatpush1.msra.mxu0 0.0
    %387 = vmatprep.subr.mxu0 0.0
    %388 = vmatpush1.msra.mxu0 0.0
    %389 = vmatprep.subr.mxu0 0.0
    %390 = vmatpush1.msra.mxu0 0.0
    %391 = vmatprep.subr.mxu0 0.0
    %392 = vmatpush1.msra.mxu0 0.0
    %393 = vmatprep.subr.mxu0 0.0
    %394 = vmatpush1.msra.mxu0 0.0
    %395 = vmatprep.subr.mxu0 0.0
    %396 = vmatpush1.msra.mxu0 0.0
    %397 = vmatprep.subr.mxu0 0.0
    %398 = vmatpush1.msra.mxu0 0.0
    %399 = vmatprep.subr.mxu0 0.0
    %400 = vmatpush1.msra.mxu0 0.0
    %401 = vmatprep.subr.mxu0 0.0
    %402 = vmatpush1.msra.mxu0 0.0
    %403 = vmatprep.subr.mxu0 0.0
    %404 = vmatpush1.msra.mxu0 0.0
    %405 = vmatprep.subr.mxu0 0.0
    %406 = vmatpush1.msra.mxu0 0.0
    %407 = vmatprep.subr.mxu0 0.0
    %408 = vmatpush1.msra.mxu0 0.0
    %409 = vmatprep.subr.mxu0 0.0
    %410 = vmatpush1.msra.mxu0 0.0
    %411 = vmatprep.subr.mxu0 0.0
    %412 = vmatpush1.msra.mxu0 0.0
    %413 = vmatprep.subr.mxu0 0.0
    %414 = vmatpush1.msra.mxu0 0.0
    %415 = vmatprep.subr.mxu0 0.0
    %416 = vmatpush1.msra.mxu0 0.0
    %417 = vmatprep.subr.mxu0 0.0
    %418 = vmatpush1.msra.mxu0 0.0
    %419 = vmatprep.subr.mxu0 0.0
    %420 = vmatpush1.msra.mxu0 0.0
    %421 = vmatprep.subr.mxu0 0.0
    %422 = vmatpush1.msra.mxu0 0.0
    %423 = vmatprep.subr.mxu0 0.0
    %424 = vmatpush1.msra.mxu0 0.0
    %425 = vmatprep.subr.mxu0 0.0
    %426 = vmatpush1.msra.mxu0 0.0
    %427 = vmatprep.subr.mxu0 0.0
    %428 = vmatpush1.msra.mxu0 0.0
    %429 = vmatprep.subr.mxu0 0.0
    %430 = vmatpush1.msra.mxu0 0.0
    %431 = vmatprep.subr.mxu0 0.0
    %432 = vmatpush1.msra.mxu0 0.0
    %433 = vmatprep.subr.mxu0 0.0
    %434 = vmatpush1.msra.mxu0 0.0
    %435 = vmatprep.subr.mxu0 0.0
    %436 = vmatpush1.msra.mxu0 0.0
    %437 = vmatprep.subr.mxu0 0.0
    %438 = vmatpush1.msra.mxu0 0.0
    %439 = vmatprep.subr.mxu0 0.0
    %440 = vmatpush1.msra.mxu0 0.0
    %441 = vmatprep.subr.mxu0 0.0
    %442 = vmatpush1.msra.mxu0 0.0
    %443 = vmatprep.subr.mxu0 0.0
    %444 = vmatpush1.msra.mxu0 0.0
    %445 = vmatprep.mubr.f32.mxu0 0.0
    %v446 = vand.u32 %v65, 4294901760
    %v447 = vsub.f32 %v65, %v446
    %v448 = vand.u32 %v447, 4294901760
    %449 = vmatmul.mubr.f32.gmra.mrb[0].mxu0 %v448
    %v450 = vpop.f32.mrb[0].mxu0
    %v451 = vadd.f32 %v355, %v450
    %v452 = vpop.f32.mrb[0].mxu0
    %453 = vmatprep.mubr.f32.mxu0 0.0
    %v454 = vand.u32 %v68, 4294901760
    %v455 = vsub.f32 %v68, %v454
    %v456 = vand.u32 %v455, 4294901760
    %457 = vmatmul.mubr.f32.gmra.mrb[0].mxu0 %v456
    %v458 = vpop.f32.mrb[0].mxu0
    %v459 = vadd.f32 %v362, %v458
    %v460 = vpop.f32.mrb[0].mxu0
    %461 = vmatprep.mubr.f32.mxu0 0.0
    %v462 = vand.u32 %v71, 4294901760
    %v463 = vsub.f32 %v71, %v462
    %v464 = vand.u32 %v463, 4294901760
    %465 = vmatmul.mubr.f32.gmra.mrb[0].mxu0 %v464
    %v466 = vpop.f32.mrb[0].mxu0
    %v467 = vadd.f32 %v369, %v466
    %v468 = vpop.f32.mrb[0].mxu0
    %469 = vmatprep.mubr.f32.mxu0 0.0
    %v470 = vand.u32 %v74, 4294901760
    %v471 = vsub.f32 %v74, %v470
    %v472 = vand.u32 %v471, 4294901760
    %473 = vmatmul.mubr.f32.gmra.mrb[0].mxu0 %v472
    %v474 = vpop.f32.mrb[0].mxu0
    %v475 = vadd.f32 %v376, %v474
    %v476 = vpop.f32.mrb[0].mxu0
    %477 = vdwg.mxu0
    %478 = vmatprep.subr.mxu0 0.0
    %v479 = vand.u32 %v33, 4294901760
    %v480 = vsub.f32 %v33, %v479
    %v481 = vand.u32 %v480, 4294901760
    %482 = vmatpush1.msra.mxu0 %v481
    %483 = vmatprep.subr.mxu0 0.0
    %v484 = vand.u32 %v34, 4294901760
    %v485 = vsub.f32 %v34, %v484
    %v486 = vand.u32 %v485, 4294901760
    %487 = vmatpush1.msra.mxu0 %v486
    %488 = vmatprep.subr.mxu0 0.0
    %489 = vmatpush1.msra.mxu0 0.0
    %490 = vmatprep.subr.mxu0 0.0
    %491 = vmatpush1.msra.mxu0 0.0
    %492 = vmatprep.subr.mxu0 0.0
    %493 = vmatpush1.msra.mxu0 0.0
    %494 = vmatprep.subr.mxu0 0.0
    %495 = vmatpush1.msra.mxu0 0.0
    %496 = vmatprep.subr.mxu0 0.0
    %497 = vmatpush1.msra.mxu0 0.0
    %498 = vmatprep.subr.mxu0 0.0
    %499 = vmatpush1.msra.mxu0 0.0
    %500 = vmatprep.subr.mxu0 0.0
    %501 = vmatpush1.msra.mxu0 0.0
    %502 = vmatprep.subr.mxu0 0.0
    %503 = vmatpush1.msra.mxu0 0.0
    %504 = vmatprep.subr.mxu0 0.0
    %505 = vmatpush1.msra.mxu0 0.0
    %506 = vmatprep.subr.mxu0 0.0
    %507 = vmatpush1.msra.mxu0 0.0
    %508 = vmatprep.subr.mxu0 0.0
    %509 = vmatpush1.msra.mxu0 0.0
    %510 = vmatprep.subr.mxu0 0.0
    %511 = vmatpush1.msra.mxu0 0.0
    %512 = vmatprep.subr.mxu0 0.0
    %513 = vmatpush1.msra.mxu0 0.0
    %514 = vmatprep.subr.mxu0 0.0
    %515 = vmatpush1.msra.mxu0 0.0
    %516 = vmatprep.subr.mxu0 0.0
    %517 = vmatpush1.msra.mxu0 0.0
    %518 = vmatprep.subr.mxu0 0.0
    %519 = vmatpush1.msra.mxu0 0.0
    %520 = vmatprep.subr.mxu0 0.0
    %521 = vmatpush1.msra.mxu0 0.0
    %522 = vmatprep.subr.mxu0 0.0
    %523 = vmatpush1.msra.mxu0 0.0
    %524 = vmatprep.subr.mxu0 0.0
    %525 = vmatpush1.msra.mxu0 0.0
    %526 = vmatprep.subr.mxu0 0.0
    %527 = vmatpush1.msra.mxu0 0.0
    %528 = vmatprep.subr.mxu0 0.0
    %529 = vmatpush1.msra.mxu0 0.0
    %530 = vmatprep.subr.mxu0 0.0
    %531 = vmatpush1.msra.mxu0 0.0
    %532 = vmatprep.subr.mxu0 0.0
    %533 = vmatpush1.msra.mxu0 0.0
    %534 = vmatprep.subr.mxu0 0.0
    %535 = vmatpush1.msra.mxu0 0.0
    %536 = vmatprep.subr.mxu0 0.0
    %537 = vmatpush1.msra.mxu0 0.0
    %538 = vmatprep.subr.mxu0 0.0
    %539 = vmatpush1.msra.mxu0 0.0
    %540 = vmatprep.subr.mxu0 0.0
    %541 = vmatpush1.msra.mxu0 0.0
    %542 = vmatprep.subr.mxu0 0.0
    %543 = vmatpush1.msra.mxu0 0.0
    %544 = vmatprep.subr.mxu0 0.0
    %545 = vmatpush1.msra.mxu0 0.0
    %546 = vmatprep.subr.mxu0 0.0
    %547 = vmatpush1.msra.mxu0 0.0
    %548 = vmatprep.mubr.f32.mxu0 0.0
    %v549 = vand.u32 %v65, 4294901760
    %550 = vmatmul.mubr.f32.gmra.mrb[0].mxu0 %v549
    %v551 = vpop.f32.mrb[0].mxu0
    %v552 = vadd.f32 %v451, %v551
    %v553 = vpop.f32.mrb[0].mxu0
    %554 = vmatprep.mubr.f32.mxu0 0.0
    %v555 = vand.u32 %v68, 4294901760
    %556 = vmatmul.mubr.f32.gmra.mrb[0].mxu0 %v555
    %v557 = vpop.f32.mrb[0].mxu0
    %v558 = vadd.f32 %v459, %v557
    %v559 = vpop.f32.mrb[0].mxu0
    %560 = vmatprep.mubr.f32.mxu0 0.0
    %v561 = vand.u32 %v71, 4294901760
    %562 = vmatmul.mubr.f32.gmra.mrb[0].mxu0 %v561
    %v563 = vpop.f32.mrb[0].mxu0
    %v564 = vadd.f32 %v467, %v563
    %v565 = vpop.f32.mrb[0].mxu0
    %566 = vmatprep.mubr.f32.mxu0 0.0
    %v567 = vand.u32 %v74, 4294901760
    %568 = vmatmul.mubr.f32.gmra.mrb[0].mxu0 %v567
    %v569 = vpop.f32.mrb[0].mxu0
    %v570 = vadd.f32 %v475, %v569
    %v571 = vpop.f32.mrb[0].mxu0
    %572 = vdwg.mxu0
    %573 = vmatprep.subr.mxu0 0.0
    %v574 = vand.u32 %v33, 4294901760
    %575 = vmatpush1.msra.mxu0 %v574
    %576 = vmatprep.subr.mxu0 0.0
    %v577 = vand.u32 %v34, 4294901760
    %578 = vmatpush1.msra.mxu0 %v577
    %579 = vmatprep.subr.mxu0 0.0
    %580 = vmatpush1.msra.mxu0 0.0
    %581 = vmatprep.subr.mxu0 0.0
    %582 = vmatpush1.msra.mxu0 0.0
    %583 = vmatprep.subr.mxu0 0.0
    %584 = vmatpush1.msra.mxu0 0.0
    %585 = vmatprep.subr.mxu0 0.0
    %586 = vmatpush1.msra.mxu0 0.0
    %587 = vmatprep.subr.mxu0 0.0
    %588 = vmatpush1.msra.mxu0 0.0
    %589 = vmatprep.subr.mxu0 0.0
    %590 = vmatpush1.msra.mxu0 0.0
    %591 = vmatprep.subr.mxu0 0.0
    %592 = vmatpush1.msra.mxu0 0.0
    %593 = vmatprep.subr.mxu0 0.0
    %594 = vmatpush1.msra.mxu0 0.0
    %595 = vmatprep.subr.mxu0 0.0
    %596 = vmatpush1.msra.mxu0 0.0
    %597 = vmatprep.subr.mxu0 0.0
    %598 = vmatpush1.msra.mxu0 0.0
    %599 = vmatprep.subr.mxu0 0.0
    %600 = vmatpush1.msra.mxu0 0.0
    %601 = vmatprep.subr.mxu0 0.0
    %602 = vmatpush1.msra.mxu0 0.0
    %603 = vmatprep.subr.mxu0 0.0
    %604 = vmatpush1.msra.mxu0 0.0
    %605 = vmatprep.subr.mxu0 0.0
    %606 = vmatpush1.msra.mxu0 0.0
    %607 = vmatprep.subr.mxu0 0.0
    %608 = vmatpush1.msra.mxu0 0.0
    %609 = vmatprep.subr.mxu0 0.0
    %610 = vmatpush1.msra.mxu0 0.0
    %611 = vmatprep.subr.mxu0 0.0
    %612 = vmatpush1.msra.mxu0 0.0
    %613 = vmatprep.subr.mxu0 0.0
    %614 = vmatpush1.msra.mxu0 0.0
    %615 = vmatprep.subr.mxu0 0.0
    %616 = vmatpush1.msra.mxu0 0.0
    %617 = vmatprep.subr.mxu0 0.0
    %618 = vmatpush1.msra.mxu0 0.0
    %619 = vmatprep.subr.mxu0 0.0
    %620 = vmatpush1.msra.mxu0 0.0
    %621 = vmatprep.subr.mxu0 0.0
    %622 = vmatpush1.msra.mxu0 0.0
    %623 = vmatprep.subr.mxu0 0.0
    %624 = vmatpush1.msra.mxu0 0.0
    %625 = vmatprep.subr.mxu0 0.0
    %626 = vmatpush1.msra.mxu0 0.0
    %627 = vmatprep.subr.mxu0 0.0
    %628 = vmatpush1.msra.mxu0 0.0
    %629 = vmatprep.subr.mxu0 0.0
    %630 = vmatpush1.msra.mxu0 0.0
    %631 = vmatprep.subr.mxu0 0.0
    %632 = vmatpush1.msra.mxu0 0.0
    %633 = vmatprep.subr.mxu0 0.0
    %634 = vmatpush1.msra.mxu0 0.0
    %635 = vmatprep.subr.mxu0 0.0
    %636 = vmatpush1.msra.mxu0 0.0
    %637 = vmatprep.subr.mxu0 0.0
    %638 = vmatpush1.msra.mxu0 0.0
    %639 = vmatprep.mubr.f32.mxu0 0.0
    %v640 = vand.u32 %v65, 4294901760
    %641 = vmatmul.mubr.f32.gmra.mrb[0].mxu0 %v640
    %v642 = vpop.f32.mrb[0].mxu0
    %v643 = vadd.f32 %v552, %v642
    %v644 = vpop.f32.mrb[0].mxu0
    %645 = vmatprep.mubr.f32.mxu0 0.0
    %v646 = vand.u32 %v68, 4294901760
    %647 = vmatmul.mubr.f32.gmra.mrb[0].mxu0 %v646
    %v648 = vpop.f32.mrb[0].mxu0
    %v649 = vadd.f32 %v558, %v648
    %v650 = vpop.f32.mrb[0].mxu0
    %651 = vmatprep.mubr.f32.mxu0 0.0
    %v652 = vand.u32 %v71, 4294901760
    %653 = vmatmul.mubr.f32.gmra.mrb[0].mxu0 %v652
    %v654 = vpop.f32.mrb[0].mxu0
    %v655 = vadd.f32 %v564, %v654
    %v656 = vpop.f32.mrb[0].mxu0
    %657 = vmatprep.mubr.f32.mxu0 0.0
    %v658 = vand.u32 %v74, 4294901760
    %659 = vmatmul.mubr.f32.gmra.mrb[0].mxu0 %v658
    %v660 = vpop.f32.mrb[0].mxu0
    %v661 = vadd.f32 %v570, %v660
    %v662 = vpop.f32.mrb[0].mxu0
    %663 = vdwg.mxu0
    %v664 = vmax.f32 %v643, 0.0
    %v665 = vmax.f32 %v649, 0.0
    %v666 = vmax.f32 %v655, 0.0
    %v667 = vmax.f32 %v661, 0.0
    %v668 = vld [vmem:[%s3] sm:$0xff]
    %v669 = vld [vmem:[%s3 + $0x8] sm:$0xff]
    %v670 = vld [vmem:[%s3 + $0x10] sm:$0xff]
    %v671 = vld [vmem:[%s3 + $0x18] sm:$0xff]
    %v672 = vld [vmem:[%s4] sm:$0xff]
    %v673 = vld [vmem:[%s4 + $0x8] sm:$0xff]
    %v674 = vld [vmem:[%s4 + $0x10] sm:$0xff]
    %v675 = vld [vmem:[%s4 + $0x18] sm:$0xff]
    %677 = vset.pattern.permute.xlu0 0
    %678 = vperm.xlu0 %677, %v672
    %v679 = vpop.permute.xlu0 %678
    %682 = vset.pattern.permute.xlu0 0
    %683 = vperm.xlu0 %682, %v673
    %v684 = vpop.permute.xlu0 %683
    %687 = vset.pattern.permute.xlu0 0
    %688 = vperm.xlu0 %687, %v674
    %v689 = vpop.permute.xlu0 %688
    %692 = vset.pattern.permute.xlu0 0
    %693 = vperm.xlu0 %692, %v675
    %v694 = vpop.permute.xlu0 %693
    %vm696 = vcmask 261120
    %v698 = vsel %vm696, %v668, 0
    %v701 = vsel %vm696, %v669, 0
    %v704 = vsel %vm696, %v670, 0
    %v707 = vsel %vm696, %v671, 0
    %709 = vmatprep.subr.mxu0 0.0
    %v710 = vand.u32 %v664, 4294901760
    %711 = vmatpush1.msra.mxu0 %v710
    %712 = vmatprep.subr.mxu0 0.0
    %v713 = vand.u32 %v665, 4294901760
    %714 = vmatpush1.msra.mxu0 %v713
    %715 = vmatprep.subr.mxu0 0.0
    %v716 = vand.u32 %v666, 4294901760
    %717 = vmatpush1.msra.mxu0 %v716
    %718 = vmatprep.subr.mxu0 0.0
    %v719 = vand.u32 %v667, 4294901760
    %720 = vmatpush1.msra.mxu0 %v719
    %721 = vmatprep.subr.mxu0 0.0
    %722 = vmatpush1.msra.mxu0 0.0
    %723 = vmatprep.subr.mxu0 0.0
    %724 = vmatpush1.msra.mxu0 0.0
    %725 = vmatprep.subr.mxu0 0.0
    %726 = vmatpush1.msra.mxu0 0.0
    %727 = vmatprep.subr.mxu0 0.0
    %728 = vmatpush1.msra.mxu0 0.0
    %729 = vmatprep.subr.mxu0 0.0
    %730 = vmatpush1.msra.mxu0 0.0
    %731 = vmatprep.subr.mxu0 0.0
    %732 = vmatpush1.msra.mxu0 0.0
    %733 = vmatprep.subr.mxu0 0.0
    %734 = vmatpush1.msra.mxu0 0.0
    %735 = vmatprep.subr.mxu0 0.0
    %736 = vmatpush1.msra.mxu0 0.0
    %737 = vmatprep.subr.mxu0 0.0
    %738 = vmatpush1.msra.mxu0 0.0
    %739 = vmatprep.subr.mxu0 0.0
    %740 = vmatpush1.msra.mxu0 0.0
    %741 = vmatprep.subr.mxu0 0.0
    %742 = vmatpush1.msra.mxu0 0.0
    %743 = vmatprep.subr.mxu0 0.0
    %744 = vmatpush1.msra.mxu0 0.0
    %745 = vmatprep.subr.mxu0 0.0
    %746 = vmatpush1.msra.mxu0 0.0
    %747 = vmatprep.subr.mxu0 0.0
    %748 = vmatpush1.msra.mxu0 0.0
    %749 = vmatprep.subr.mxu0 0.0
    %750 = vmatpush1.msra.mxu0 0.0
    %751 = vmatprep.subr.mxu0 0.0
    %752 = vmatpush1.msra.mxu0 0.0
    %753 = vmatprep.subr.mxu0 0.0
    %754 = vmatpush1.msra.mxu0 0.0
    %755 = vmatprep.subr.mxu0 0.0
    %756 = vmatpush1.msra.mxu0 0.0
    %757 = vmatprep.subr.mxu0 0.0
    %758 = vmatpush1.msra.mxu0 0.0
    %759 = vmatprep.subr.mxu0 0.0
    %760 = vmatpush1.msra.mxu0 0.0
    %761 = vmatprep.subr.mxu0 0.0
    %762 = vmatpush1.msra.mxu0 0.0
    %763 = vmatprep.subr.mxu0 0.0
    %764 = vmatpush1.msra.mxu0 0.0
    %765 = vmatprep.subr.mxu0 0.0
    %766 = vmatpush1.msra.mxu0 0.0
    %767 = vmatprep.subr.mxu0 0.0
    %768 = vmatpush1.msra.mxu0 0.0
    %769 = vmatprep.subr.mxu0 0.0
    %770 = vmatpush1.msra.mxu0 0.0
    %771 = vmatprep.subr.mxu0 0.0
    %772 = vmatpush1.msra.mxu0 0.0
    %773 = vmatprep.subr.mxu0 0.0
    %774 = vmatpush1.msra.mxu0 0.0
    %775 = vmatprep.subr.mxu0 0.0
    %776 = vmatpush1.msra.mxu0 0.0
    %777 = vmatprep.mubr.f32.mxu0 0.0
    %v778 = vand.u32 %v698, 4294901760
    %v779 = vsub.f32 %v698, %v778
    %v780 = vand.u32 %v779, 4294901760
    %v781 = vsub.f32 %v779, %v780
    %v782 = vand.u32 %v781, 4294901760
    %783 = vmatmul.mubr.f32.gmra.mrb[0].mxu0 %v782
    %v784 = vpop.f32.mrb[0].mxu0
    %v785 = vadd.f32 %v679, %v784
    %v786 = vpop.f32.mrb[0].mxu0
    %787 = vmatprep.mubr.f32.mxu0 0.0
    %v788 = vand.u32 %v701, 4294901760
    %v789 = vsub.f32 %v701, %v788
    %v790 = vand.u32 %v789, 4294901760
    %v791 = vsub.f32 %v789, %v790
    %v792 = vand.u32 %v791, 4294901760
    %793 = vmatmul.mubr.f32.gmra.mrb[0].mxu0 %v792
    %v794 = vpop.f32.mrb[0].mxu0
    %v795 = vadd.f32 %v684, %v794
    %v796 = vpop.f32.mrb[0].mxu0
    %797 = vmatprep.mubr.f32.mxu0 0.0
    %v798 = vand.u32 %v704, 4294901760
    %v799 = vsub.f32 %v704, %v798
    %v800 = vand.u32 %v799, 4294901760
    %v801 = vsub.f32 %v799, %v800
    %v802 = vand.u32 %v801, 4294901760
    %803 = vmatmul.mubr.f32.gmra.mrb[0].mxu0 %v802
    %v804 = vpop.f32.mrb[0].mxu0
    %v805 = vadd.f32 %v689, %v804
    %v806 = vpop.f32.mrb[0].mxu0
    %807 = vmatprep.mubr.f32.mxu0 0.0
    %v808 = vand.u32 %v707, 4294901760
    %v809 = vsub.f32 %v707, %v808
    %v810 = vand.u32 %v809, 4294901760
    %v811 = vsub.f32 %v809, %v810
    %v812 = vand.u32 %v811, 4294901760
    %813 = vmatmul.mubr.f32.gmra.mrb[0].mxu0 %v812
    %v814 = vpop.f32.mrb[0].mxu0
    %v815 = vadd.f32 %v694, %v814
    %v816 = vpop.f32.mrb[0].mxu0
    %817 = vdwg.mxu0
    %818 = vmatprep.subr.mxu0 0.0
    %v819 = vand.u32 %v664, 4294901760
    %v820 = vsub.f32 %v664, %v819
    %v821 = vand.u32 %v820, 4294901760
    %v822 = vsub.f32 %v820, %v821
    %v823 = vand.u32 %v822, 4294901760
    %824 = vmatpush1.msra.mxu0 %v823
    %825 = vmatprep.subr.mxu0 0.0
    %v826 = vand.u32 %v665, 4294901760
    %v827 = vsub.f32 %v665, %v826
    %v828 = vand.u32 %v827, 4294901760
    %v829 = vsub.f32 %v827, %v828
    %v830 = vand.u32 %v829, 4294901760
    %831 = vmatpush1.msra.mxu0 %v830
    %832 = vmatprep.subr.mxu0 0.0
    %v833 = vand.u32 %v666, 4294901760
    %v834 = vsub.f32 %v666, %v833
    %v835 = vand.u32 %v834, 4294901760
    %v836 = vsub.f32 %v834, %v835
    %v837 = vand.u32 %v836, 4294901760
    %838 = vmatpush1.msra.mxu0 %v837
    %839 = vmatprep.subr.mxu0 0.0
    %v840 = vand.u32 %v667, 4294901760
    %v841 = vsub.f32 %v667, %v840
    %v842 = vand.u32 %v841, 4294901760
    %v843 = vsub.f32 %v841, %v842
    %v844 = vand.u32 %v843, 4294901760
    %845 = vmatpush1.msra.mxu0 %v844
    %846 = vmatprep.subr.mxu0 0.0
    %847 = vmatpush1.msra.mxu0 0.0
    %848 = vmatprep.subr.mxu0 0.0
    %849 = vmatpush1.msra.mxu0 0.0
    %850 = vmatprep.subr.mxu0 0.0
    %851 = vmatpush1.msra.mxu0 0.0
    %852 = vmatprep.subr.mxu0 0.0
    %853 = vmatpush1.msra.mxu0 0.0
    %854 = vmatprep.subr.mxu0 0.0
    %855 = vmatpush1.msra.mxu0 0.0
    %856 = vmatprep.subr.mxu0 0.0
    %857 = vmatpush1.msra.mxu0 0.0
    %858 = vmatprep.subr.mxu0 0.0
    %859 = vmatpush1.msra.mxu0 0.0
    %860 = vmatprep.subr.mxu0 0.0
    %861 = vmatpush1.msra.mxu0 0.0
    %862 = vmatprep.subr.mxu0 0.0
    %863 = vmatpush1.msra.mxu0 0.0
    %864 = vmatprep.subr.mxu0 0.0
    %865 = vmatpush1.msra.mxu0 0.0
    %866 = vmatprep.subr.mxu0 0.0
    %867 = vmatpush1.msra.mxu0 0.0
    %868 = vmatprep.subr.mxu0 0.0
    %869 = vmatpush1.msra.mxu0 0.0
    %870 = vmatprep.subr.mxu0 0.0
    %871 = vmatpush1.msra.mxu0 0.0
    %872 = vmatprep.subr.mxu0 0.0
    %873 = vmatpush1.msra.mxu0 0.0
    %874 = vmatprep.subr.mxu0 0.0
    %875 = vmatpush1.msra.mxu0 0.0
    %876 = vmatprep.subr.mxu0 0.0
    %877 = vmatpush1.msra.mxu0 0.0
    %878 = vmatprep.subr.mxu0 0.0
    %879 = vmatpush1.msra.mxu0 0.0
    %880 = vmatprep.subr.mxu0 0.0
    %881 = vmatpush1.msra.mxu0 0.0
    %882 = vmatprep.subr.mxu0 0.0
    %883 = vmatpush1.msra.mxu0 0.0
    %884 = vmatprep.subr.mxu0 0.0
    %885 = vmatpush1.msra.mxu0 0.0
    %886 = vmatprep.subr.mxu0 0.0
    %887 = vmatpush1.msra.mxu0 0.0
    %888 = vmatprep.subr.mxu0 0.0
    %889 = vmatpush1.msra.mxu0 0.0
    %890 = vmatprep.subr.mxu0 0.0
    %891 = vmatpush1.msra.mxu0 0.0
    %892 = vmatprep.subr.mxu0 0.0
    %893 = vmatpush1.msra.mxu0 0.0
    %894 = vmatprep.subr.mxu0 0.0
    %895 = vmatpush1.msra.mxu0 0.0
    %896 = vmatprep.subr.mxu0 0.0
    %897 = vmatpush1.msra.mxu0 0.0
    %898 = vmatprep.subr.mxu0 0.0
    %899 = vmatpush1.msra.mxu0 0.0
    %900 = vmatprep.subr.mxu0 0.0
    %901 = vmatpush1.msra.mxu0 0.0
    %902 = vmatprep.mubr.f32.mxu0 0.0
    %v903 = vand.u32 %v698, 4294901760
    %904 = vmatmul.mubr.f32.gmra.mrb[0].mxu0 %v903
    %v905 = vpop.f32.mrb[0].mxu0
    %v906 = vadd.f32 %v785, %v905
    %v907 = vpop.f32.mrb[0].mxu0
    %908 = vmatprep.mubr.f32.mxu0 0.0
    %v909 = vand.u32 %v701, 4294901760
    %910 = vmatmul.mubr.f32.gmra.mrb[0].mxu0 %v909
    %v911 = vpop.f32.mrb[0].mxu0
    %v912 = vadd.f32 %v795, %v911
    %v913 = vpop.f32.mrb[0].mxu0
    %914 = vmatprep.mubr.f32.mxu0 0.0
    %v915 = vand.u32 %v704, 4294901760
    %916 = vmatmul.mubr.f32.gmra.mrb[0].mxu0 %v915
    %v917 = vpop.f32.mrb[0].mxu0
    %v918 = vadd.f32 %v805, %v917
    %v919 = vpop.f32.mrb[0].mxu0
    %920 = vmatprep.mubr.f32.mxu0 0.0
    %v921 = vand.u32 %v707, 4294901760
    %922 = vmatmul.mubr.f32.gmra.mrb[0].mxu0 %v921
    %v923 = vpop.f32.mrb[0].mxu0
    %v924 = vadd.f32 %v815, %v923
    %v925 = vpop.f32.mrb[0].mxu0
    %926 = vdwg.mxu0
    %927 = vmatprep.subr.mxu0 0.0
    %v928 = vand.u32 %v664, 4294901760
    %v929 = vsub.f32 %v664, %v928
    %930 = vmatpush1.msra.mxu0 %v929
    %931 = vmatprep.subr.mxu0 0.0
    %v932 = vand.u32 %v665, 4294901760
    %v933 = vsub.f32 %v665, %v932
    %934 = vmatpush1.msra.mxu0 %v933
    %935 = vmatprep.subr.mxu0 0.0
    %v936 = vand.u32 %v666, 4294901760
    %v937 = vsub.f32 %v666, %v936
    %938 = vmatpush1.msra.mxu0 %v937
    %939 = vmatprep.subr.mxu0 0.0
    %v940 = vand.u32 %v667, 4294901760
    %v941 = vsub.f32 %v667, %v940
    %942 = vmatpush1.msra.mxu0 %v941
    %943 = vmatprep.subr.mxu0 0.0
    %944 = vmatpush1.msra.mxu0 0.0
    %945 = vmatprep.subr.mxu0 0.0
    %946 = vmatpush1.msra.mxu0 0.0
    %947 = vmatprep.subr.mxu0 0.0
    %948 = vmatpush1.msra.mxu0 0.0
    %949 = vmatprep.subr.mxu0 0.0
    %950 = vmatpush1.msra.mxu0 0.0
    %951 = vmatprep.subr.mxu0 0.0
    %952 = vmatpush1.msra.mxu0 0.0
    %953 = vmatprep.subr.mxu0 0.0
    %954 = vmatpush1.msra.mxu0 0.0
    %955 = vmatprep.subr.mxu0 0.0
    %956 = vmatpush1.msra.mxu0 0.0
    %957 = vmatprep.subr.mxu0 0.0
    %958 = vmatpush1.msra.mxu0 0.0
    %959 = vmatprep.subr.mxu0 0.0
    %960 = vmatpush1.msra.mxu0 0.0
    %961 = vmatprep.subr.mxu0 0.0
    %962 = vmatpush1.msra.mxu0 0.0
    %963 = vmatprep.subr.mxu0 0.0
    %964 = vmatpush1.msra.mxu0 0.0
    %965 = vmatprep.subr.mxu0 0.0
    %966 = vmatpush1.msra.mxu0 0.0
    %967 = vmatprep.subr.mxu0 0.0
    %968 = vmatpush1.msra.mxu0 0.0
    %969 = vmatprep.subr.mxu0 0.0
    %970 = vmatpush1.msra.mxu0 0.0
    %971 = vmatprep.subr.mxu0 0.0
    %972 = vmatpush1.msra.mxu0 0.0
    %973 = vmatprep.subr.mxu0 0.0
    %974 = vmatpush1.msra.mxu0 0.0
    %975 = vmatprep.subr.mxu0 0.0
    %976 = vmatpush1.msra.mxu0 0.0
    %977 = vmatprep.subr.mxu0 0.0
    %978 = vmatpush1.msra.mxu0 0.0
    %979 = vmatprep.subr.mxu0 0.0
    %980 = vmatpush1.msra.mxu0 0.0
    %981 = vmatprep.subr.mxu0 0.0
    %982 = vmatpush1.msra.mxu0 0.0
    %983 = vmatprep.subr.mxu0 0.0
    %984 = vmatpush1.msra.mxu0 0.0
    %985 = vmatprep.subr.mxu0 0.0
    %986 = vmatpush1.msra.mxu0 0.0
    %987 = vmatprep.subr.mxu0 0.0
    %988 = vmatpush1.msra.mxu0 0.0
    %989 = vmatprep.subr.mxu0 0.0
    %990 = vmatpush1.msra.mxu0 0.0
    %991 = vmatprep.subr.mxu0 0.0
    %992 = vmatpush1.msra.mxu0 0.0
    %993 = vmatprep.subr.mxu0 0.0
    %994 = vmatpush1.msra.mxu0 0.0
    %995 = vmatprep.subr.mxu0 0.0
    %996 = vmatpush1.msra.mxu0 0.0
    %997 = vmatprep.subr.mxu0 0.0
    %998 = vmatpush1.msra.mxu0 0.0
    %999 = vmatprep.mubr.f32.mxu0 0.0
    %v1000 = vand.u32 %v698, 4294901760
    %v1001 = vsub.f32 %v698, %v1000
    %1002 = vmatmul.mubr.f32.gmra.mrb[0].mxu0 %v1001
    %v1003 = vpop.f32.mrb[0].mxu0
    %v1004 = vadd.f32 %v906, %v1003
    %v1005 = vpop.f32.mrb[0].mxu0
    %1006 = vmatprep.mubr.f32.mxu0 0.0
    %v1007 = vand.u32 %v701, 4294901760
    %v1008 = vsub.f32 %v701, %v1007
    %1009 = vmatmul.mubr.f32.gmra.mrb[0].mxu0 %v1008
    %v1010 = vpop.f32.mrb[0].mxu0
    %v1011 = vadd.f32 %v912, %v1010
    %v1012 = vpop.f32.mrb[0].mxu0
    %1013 = vmatprep.mubr.f32.mxu0 0.0
    %v1014 = vand.u32 %v704, 4294901760
    %v1015 = vsub.f32 %v704, %v1014
    %1016 = vmatmul.mubr.f32.gmra.mrb[0].mxu0 %v1015
    %v1017 = vpop.f32.mrb[0].mxu0
    %v1018 = vadd.f32 %v918, %v1017
    %v1019 = vpop.f32.mrb[0].mxu0
    %1020 = vmatprep.mubr.f32.mxu0 0.0
    %v1021 = vand.u32 %v707, 4294901760
    %v1022 = vsub.f32 %v707, %v1021
    %1023 = vmatmul.mubr.f32.gmra.mrb[0].mxu0 %v1022
    %v1024 = vpop.f32.mrb[0].mxu0
    %v1025 = vadd.f32 %v924, %v1024
    %v1026 = vpop.f32.mrb[0].mxu0
    %1027 = vdwg.mxu0
    %1028 = vmatprep.subr.mxu0 0.0
    %v1029 = vand.u32 %v664, 4294901760
    %1030 = vmatpush1.msra.mxu0 %v1029
    %1031 = vmatprep.subr.mxu0 0.0
    %v1032 = vand.u32 %v665, 4294901760
    %1033 = vmatpush1.msra.mxu0 %v1032
    %1034 = vmatprep.subr.mxu0 0.0
    %v1035 = vand.u32 %v666, 4294901760
    %1036 = vmatpush1.msra.mxu0 %v1035
    %1037 = vmatprep.subr.mxu0 0.0
    %v1038 = vand.u32 %v667, 4294901760
    %1039 = vmatpush1.msra.mxu0 %v1038
    %1040 = vmatprep.subr.mxu0 0.0
    %1041 = vmatpush1.msra.mxu0 0.0
    %1042 = vmatprep.subr.mxu0 0.0
    %1043 = vmatpush1.msra.mxu0 0.0
    %1044 = vmatprep.subr.mxu0 0.0
    %1045 = vmatpush1.msra.mxu0 0.0
    %1046 = vmatprep.subr.mxu0 0.0
    %1047 = vmatpush1.msra.mxu0 0.0
    %1048 = vmatprep.subr.mxu0 0.0
    %1049 = vmatpush1.msra.mxu0 0.0
    %1050 = vmatprep.subr.mxu0 0.0
    %1051 = vmatpush1.msra.mxu0 0.0
    %1052 = vmatprep.subr.mxu0 0.0
    %1053 = vmatpush1.msra.mxu0 0.0
    %1054 = vmatprep.subr.mxu0 0.0
    %1055 = vmatpush1.msra.mxu0 0.0
    %1056 = vmatprep.subr.mxu0 0.0
    %1057 = vmatpush1.msra.mxu0 0.0
    %1058 = vmatprep.subr.mxu0 0.0
    %1059 = vmatpush1.msra.mxu0 0.0
    %1060 = vmatprep.subr.mxu0 0.0
    %1061 = vmatpush1.msra.mxu0 0.0
    %1062 = vmatprep.subr.mxu0 0.0
    %1063 = vmatpush1.msra.mxu0 0.0
    %1064 = vmatprep.subr.mxu0 0.0
    %1065 = vmatpush1.msra.mxu0 0.0
    %1066 = vmatprep.subr.mxu0 0.0
    %1067 = vmatpush1.msra.mxu0 0.0
    %1068 = vmatprep.subr.mxu0 0.0
    %1069 = vmatpush1.msra.mxu0 0.0
    %1070 = vmatprep.subr.mxu0 0.0
    %1071 = vmatpush1.msra.mxu0 0.0
    %1072 = vmatprep.subr.mxu0 0.0
    %1073 = vmatpush1.msra.mxu0 0.0
    %1074 = vmatprep.subr.mxu0 0.0
    %1075 = vmatpush1.msra.mxu0 0.0
    %1076 = vmatprep.subr.mxu0 0.0
    %1077 = vmatpush1.msra.mxu0 0.0
    %1078 = vmatprep.subr.mxu0 0.0
    %1079 = vmatpush1.msra.mxu0 0.0
    %1080 = vmatprep.subr.mxu0 0.0
    %1081 = vmatpush1.msra.mxu0 0.0
    %1082 = vmatprep.subr.mxu0 0.0
    %1083 = vmatpush1.msra.mxu0 0.0
    %1084 = vmatprep.subr.mxu0 0.0
    %1085 = vmatpush1.msra.mxu0 0.0
    %1086 = vmatprep.subr.mxu0 0.0
    %1087 = vmatpush1.msra.mxu0 0.0
    %1088 = vmatprep.subr.mxu0 0.0
    %1089 = vmatpush1.msra.mxu0 0.0
    %1090 = vmatprep.subr.mxu0 0.0
    %1091 = vmatpush1.msra.mxu0 0.0
    %1092 = vmatprep.subr.mxu0 0.0
    %1093 = vmatpush1.msra.mxu0 0.0
    %1094 = vmatprep.subr.mxu0 0.0
    %1095 = vmatpush1.msra.mxu0 0.0
    %1096 = vmatprep.mubr.f32.mxu0 0.0
    %v1097 = vand.u32 %v698, 4294901760
    %v1098 = vsub.f32 %v698, %v1097
    %v1099 = vand.u32 %v1098, 4294901760
    %1100 = vmatmul.mubr.f32.gmra.mrb[0].mxu0 %v1099
    %v1101 = vpop.f32.mrb[0].mxu0
    %v1102 = vadd.f32 %v1004, %v1101
    %v1103 = vpop.f32.mrb[0].mxu0
    %1104 = vmatprep.mubr.f32.mxu0 0.0
    %v1105 = vand.u32 %v701, 4294901760
    %v1106 = vsub.f32 %v701, %v1105
    %v1107 = vand.u32 %v1106, 4294901760
    %1108 = vmatmul.mubr.f32.gmra.mrb[0].mxu0 %v1107
    %v1109 = vpop.f32.mrb[0].mxu0
    %v1110 = vadd.f32 %v1011, %v1109
    %v1111 = vpop.f32.mrb[0].mxu0
    %1112 = vmatprep.mubr.f32.mxu0 0.0
    %v1113 = vand.u32 %v704, 4294901760
    %v1114 = vsub.f32 %v704, %v1113
    %v1115 = vand.u32 %v1114, 4294901760
    %1116 = vmatmul.mubr.f32.gmra.mrb[0].mxu0 %v1115
    %v1117 = vpop.f32.mrb[0].mxu0
    %v1118 = vadd.f32 %v1018, %v1117
    %v1119 = vpop.f32.mrb[0].mxu0
    %1120 = vmatprep.mubr.f32.mxu0 0.0
    %v1121 = vand.u32 %v707, 4294901760
    %v1122 = vsub.f32 %v707, %v1121
    %v1123 = vand.u32 %v1122, 4294901760
    %1124 = vmatmul.mubr.f32.gmra.mrb[0].mxu0 %v1123
    %v1125 = vpop.f32.mrb[0].mxu0
    %v1126 = vadd.f32 %v1025, %v1125
    %v1127 = vpop.f32.mrb[0].mxu0
    %1128 = vdwg.mxu0
    %1129 = vmatprep.subr.mxu0 0.0
    %v1130 = vand.u32 %v664, 4294901760
    %v1131 = vsub.f32 %v664, %v1130
    %v1132 = vand.u32 %v1131, 4294901760
    %1133 = vmatpush1.msra.mxu0 %v1132
    %1134 = vmatprep.subr.mxu0 0.0
    %v1135 = vand.u32 %v665, 4294901760
    %v1136 = vsub.f32 %v665, %v1135
    %v1137 = vand.u32 %v1136, 4294901760
    %1138 = vmatpush1.msra.mxu0 %v1137
    %1139 = vmatprep.subr.mxu0 0.0
    %v1140 = vand.u32 %v666, 4294901760
    %v1141 = vsub.f32 %v666, %v1140
    %v1142 = vand.u32 %v1141, 4294901760
    %1143 = vmatpush1.msra.mxu0 %v1142
    %1144 = vmatprep.subr.mxu0 0.0
    %v1145 = vand.u32 %v667, 4294901760
    %v1146 = vsub.f32 %v667, %v1145
    %v1147 = vand.u32 %v1146, 4294901760
    %1148 = vmatpush1.msra.mxu0 %v1147
    %1149 = vmatprep.subr.mxu0 0.0
    %1150 = vmatpush1.msra.mxu0 0.0
    %1151 = vmatprep.subr.mxu0 0.0
    %1152 = vmatpush1.msra.mxu0 0.0
    %1153 = vmatprep.subr.mxu0 0.0
    %1154 = vmatpush1.msra.mxu0 0.0
    %1155 = vmatprep.subr.mxu0 0.0
    %1156 = vmatpush1.msra.mxu0 0.0
    %1157 = vmatprep.subr.mxu0 0.0
    %1158 = vmatpush1.msra.mxu0 0.0
    %1159 = vmatprep.subr.mxu0 0.0
    %1160 = vmatpush1.msra.mxu0 0.0
    %1161 = vmatprep.subr.mxu0 0.0
    %1162 = vmatpush1.msra.mxu0 0.0
    %1163 = vmatprep.subr.mxu0 0.0
    %1164 = vmatpush1.msra.mxu0 0.0
    %1165 = vmatprep.subr.mxu0 0.0
    %1166 = vmatpush1.msra.mxu0 0.0
    %1167 = vmatprep.subr.mxu0 0.0
    %1168 = vmatpush1.msra.mxu0 0.0
    %1169 = vmatprep.subr.mxu0 0.0
    %1170 = vmatpush1.msra.mxu0 0.0
    %1171 = vmatprep.subr.mxu0 0.0
    %1172 = vmatpush1.msra.mxu0 0.0
    %1173 = vmatprep.subr.mxu0 0.0
    %1174 = vmatpush1.msra.mxu0 0.0
    %1175 = vmatprep.subr.mxu0 0.0
    %1176 = vmatpush1.msra.mxu0 0.0
    %1177 = vmatprep.subr.mxu0 0.0
    %1178 = vmatpush1.msra.mxu0 0.0
    %1179 = vmatprep.subr.mxu0 0.0
    %1180 = vmatpush1.msra.mxu0 0.0
    %1181 = vmatprep.subr.mxu0 0.0
    %1182 = vmatpush1.msra.mxu0 0.0
    %1183 = vmatprep.subr.mxu0 0.0
    %1184 = vmatpush1.msra.mxu0 0.0
    %1185 = vmatprep.subr.mxu0 0.0
    %1186 = vmatpush1.msra.mxu0 0.0
    %1187 = vmatprep.subr.mxu0 0.0
    %1188 = vmatpush1.msra.mxu0 0.0
    %1189 = vmatprep.subr.mxu0 0.0
    %1190 = vmatpush1.msra.mxu0 0.0
    %1191 = vmatprep.subr.mxu0 0.0
    %1192 = vmatpush1.msra.mxu0 0.0
    %1193 = vmatprep.subr.mxu0 0.0
    %1194 = vmatpush1.msra.mxu0 0.0
    %1195 = vmatprep.subr.mxu0 0.0
    %1196 = vmatpush1.msra.mxu0 0.0
    %1197 = vmatprep.subr.mxu0 0.0
    %1198 = vmatpush1.msra.mxu0 0.0
    %1199 = vmatprep.subr.mxu0 0.0
    %1200 = vmatpush1.msra.mxu0 0.0
    %1201 = vmatprep.subr.mxu0 0.0
    %1202 = vmatpush1.msra.mxu0 0.0
    %1203 = vmatprep.subr.mxu0 0.0
    %1204 = vmatpush1.msra.mxu0 0.0
    %1205 = vmatprep.mubr.f32.mxu0 0.0
    %v1206 = vand.u32 %v698, 4294901760
    %1207 = vmatmul.mubr.f32.gmra.mrb[0].mxu0 %v1206
    %v1208 = vpop.f32.mrb[0].mxu0
    %v1209 = vadd.f32 %v1102, %v1208
    %v1210 = vpop.f32.mrb[0].mxu0
    %1211 = vmatprep.mubr.f32.mxu0 0.0
    %v1212 = vand.u32 %v701, 4294901760
    %1213 = vmatmul.mubr.f32.gmra.mrb[0].mxu0 %v1212
    %v1214 = vpop.f32.mrb[0].mxu0
    %v1215 = vadd.f32 %v1110, %v1214
    %v1216 = vpop.f32.mrb[0].mxu0
    %1217 = vmatprep.mubr.f32.mxu0 0.0
    %v1218 = vand.u32 %v704, 4294901760
    %1219 = vmatmul.mubr.f32.gmra.mrb[0].mxu0 %v1218
    %v1220 = vpop.f32.mrb[0].mxu0
    %v1221 = vadd.f32 %v1118, %v1220
    %v1222 = vpop.f32.mrb[0].mxu0
    %1223 = vmatprep.mubr.f32.mxu0 0.0
    %v1224 = vand.u32 %v707, 4294901760
    %1225 = vmatmul.mubr.f32.gmra.mrb[0].mxu0 %v1224
    %v1226 = vpop.f32.mrb[0].mxu0
    %v1227 = vadd.f32 %v1126, %v1226
    %v1228 = vpop.f32.mrb[0].mxu0
    %1229 = vdwg.mxu0
    %1230 = vmatprep.subr.mxu0 0.0
    %v1231 = vand.u32 %v664, 4294901760
    %1232 = vmatpush1.msra.mxu0 %v1231
    %1233 = vmatprep.subr.mxu0 0.0
    %v1234 = vand.u32 %v665, 4294901760
    %1235 = vmatpush1.msra.mxu0 %v1234
    %1236 = vmatprep.subr.mxu0 0.0
    %v1237 = vand.u32 %v666, 4294901760
    %1238 = vmatpush1.msra.mxu0 %v1237
    %1239 = vmatprep.subr.mxu0 0.0
    %v1240 = vand.u32 %v667, 4294901760
    %1241 = vmatpush1.msra.mxu0 %v1240
    %1242 = vmatprep.subr.mxu0 0.0
    %1243 = vmatpush1.msra.mxu0 0.0
    %1244 = vmatprep.subr.mxu0 0.0
    %1245 = vmatpush1.msra.mxu0 0.0
    %1246 = vmatprep.subr.mxu0 0.0
    %1247 = vmatpush1.msra.mxu0 0.0
    %1248 = vmatprep.subr.mxu0 0.0
    %1249 = vmatpush1.msra.mxu0 0.0
    %1250 = vmatprep.subr.mxu0 0.0
    %1251 = vmatpush1.msra.mxu0 0.0
    %1252 = vmatprep.subr.mxu0 0.0
    %1253 = vmatpush1.msra.mxu0 0.0
    %1254 = vmatprep.subr.mxu0 0.0
    %1255 = vmatpush1.msra.mxu0 0.0
    %1256 = vmatprep.subr.mxu0 0.0
    %1257 = vmatpush1.msra.mxu0 0.0
    %1258 = vmatprep.subr.mxu0 0.0
    %1259 = vmatpush1.msra.mxu0 0.0
    %1260 = vmatprep.subr.mxu0 0.0
    %1261 = vmatpush1.msra.mxu0 0.0
    %1262 = vmatprep.subr.mxu0 0.0
    %1263 = vmatpush1.msra.mxu0 0.0
    %1264 = vmatprep.subr.mxu0 0.0
    %1265 = vmatpush1.msra.mxu0 0.0
    %1266 = vmatprep.subr.mxu0 0.0
    %1267 = vmatpush1.msra.mxu0 0.0
    %1268 = vmatprep.subr.mxu0 0.0
    %1269 = vmatpush1.msra.mxu0 0.0
    %1270 = vmatprep.subr.mxu0 0.0
    %1271 = vmatpush1.msra.mxu0 0.0
    %1272 = vmatprep.subr.mxu0 0.0
    %1273 = vmatpush1.msra.mxu0 0.0
    %1274 = vmatprep.subr.mxu0 0.0
    %1275 = vmatpush1.msra.mxu0 0.0
    %1276 = vmatprep.subr.mxu0 0.0
    %1277 = vmatpush1.msra.mxu0 0.0
    %1278 = vmatprep.subr.mxu0 0.0
    %1279 = vmatpush1.msra.mxu0 0.0
    %1280 = vmatprep.subr.mxu0 0.0
    %1281 = vmatpush1.msra.mxu0 0.0
    %1282 = vmatprep.subr.mxu0 0.0
    %1283 = vmatpush1.msra.mxu0 0.0
    %1284 = vmatprep.subr.mxu0 0.0
    %1285 = vmatpush1.msra.mxu0 0.0
    %1286 = vmatprep.subr.mxu0 0.0
    %1287 = vmatpush1.msra.mxu0 0.0
    %1288 = vmatprep.subr.mxu0 0.0
    %1289 = vmatpush1.msra.mxu0 0.0
    %1290 = vmatprep.subr.mxu0 0.0
    %1291 = vmatpush1.msra.mxu0 0.0
    %1292 = vmatprep.subr.mxu0 0.0
    %1293 = vmatpush1.msra.mxu0 0.0
    %1294 = vmatprep.subr.mxu0 0.0
    %1295 = vmatpush1.msra.mxu0 0.0
    %1296 = vmatprep.subr.mxu0 0.0
    %1297 = vmatpush1.msra.mxu0 0.0
    %1298 = vmatprep.mubr.f32.mxu0 0.0
    %v1299 = vand.u32 %v698, 4294901760
    %1300 = vmatmul.mubr.f32.gmra.mrb[0].mxu0 %v1299
    %v1301 = vpop.f32.mrb[0].mxu0
    %v1302 = vadd.f32 %v1209, %v1301
    %v1303 = vpop.f32.mrb[0].mxu0
    %1304 = vmatprep.mubr.f32.mxu0 0.0
    %v1305 = vand.u32 %v701, 4294901760
    %1306 = vmatmul.mubr.f32.gmra.mrb[0].mxu0 %v1305
    %v1307 = vpop.f32.mrb[0].mxu0
    %v1308 = vadd.f32 %v1215, %v1307
    %v1309 = vpop.f32.mrb[0].mxu0
    %1310 = vmatprep.mubr.f32.mxu0 0.0
    %v1311 = vand.u32 %v704, 4294901760
    %1312 = vmatmul.mubr.f32.gmra.mrb[0].mxu0 %v1311
    %v1313 = vpop.f32.mrb[0].mxu0
    %v1314 = vadd.f32 %v1221, %v1313
    %v1315 = vpop.f32.mrb[0].mxu0
    %1316 = vmatprep.mubr.f32.mxu0 0.0
    %v1317 = vand.u32 %v707, 4294901760
    %1318 = vmatmul.mubr.f32.gmra.mrb[0].mxu0 %v1317
    %v1319 = vpop.f32.mrb[0].mxu0
    %v1320 = vadd.f32 %v1227, %v1319
    %v1321 = vpop.f32.mrb[0].mxu0
    %1322 = vdwg.mxu0
    %v1323 = vtanh.pop %v1302
    %v1324 = vtanh.pop %v1308
    %v1325 = vtanh.pop %v1314
    %v1326 = vtanh.pop %v1320
    %v1327 = vld [vmem:[%s5] sm:$0xff]
    %v1328 = vld [vmem:[%s5 + $0x8] sm:$0xff]
    %v1329 = vld [vmem:[%s6] sm:$0xff]
    %v1330 = vld [vmem:[%s6 + $0x8] sm:$0xff]
    %1332 = vset.pattern.permute.xlu0 0
    %1333 = vperm.xlu0 %1332, %v1329
    %v1334 = vpop.permute.xlu0 %1333
    %1337 = vset.pattern.permute.xlu0 0
    %1338 = vperm.xlu0 %1337, %v1330
    %v1339 = vpop.permute.xlu0 %1338
    %v1342 = vsel %vm696, %v1327, 0
    %v1345 = vsel %vm696, %v1328, 0
    %1347 = vmatprep.subr.mxu0 0.0
    %v1348 = vand.u32 %v1323, 4294901760
    %1349 = vmatpush1.msra.mxu0 %v1348
    %1350 = vmatprep.subr.mxu0 0.0
    %v1351 = vand.u32 %v1324, 4294901760
    %1352 = vmatpush1.msra.mxu0 %v1351
    %1353 = vmatprep.subr.mxu0 0.0
    %v1354 = vand.u32 %v1325, 4294901760
    %1355 = vmatpush1.msra.mxu0 %v1354
    %1356 = vmatprep.subr.mxu0 0.0
    %v1357 = vand.u32 %v1326, 4294901760
    %1358 = vmatpush1.msra.mxu0 %v1357
    %1359 = vmatprep.subr.mxu0 0.0
    %1360 = vmatpush1.msra.mxu0 0.0
    %1361 = vmatprep.subr.mxu0 0.0
    %1362 = vmatpush1.msra.mxu0 0.0
    %1363 = vmatprep.subr.mxu0 0.0
    %1364 = vmatpush1.msra.mxu0 0.0
    %1365 = vmatprep.subr.mxu0 0.0
    %1366 = vmatpush1.msra.mxu0 0.0
    %1367 = vmatprep.subr.mxu0 0.0
    %1368 = vmatpush1.msra.mxu0 0.0
    %1369 = vmatprep.subr.mxu0 0.0
    %1370 = vmatpush1.msra.mxu0 0.0
    %1371 = vmatprep.subr.mxu0 0.0
    %1372 = vmatpush1.msra.mxu0 0.0
    %1373 = vmatprep.subr.mxu0 0.0
    %1374 = vmatpush1.msra.mxu0 0.0
    %1375 = vmatprep.subr.mxu0 0.0
    %1376 = vmatpush1.msra.mxu0 0.0
    %1377 = vmatprep.subr.mxu0 0.0
    %1378 = vmatpush1.msra.mxu0 0.0
    %1379 = vmatprep.subr.mxu0 0.0
    %1380 = vmatpush1.msra.mxu0 0.0
    %1381 = vmatprep.subr.mxu0 0.0
    %1382 = vmatpush1.msra.mxu0 0.0
    %1383 = vmatprep.subr.mxu0 0.0
    %1384 = vmatpush1.msra.mxu0 0.0
    %1385 = vmatprep.subr.mxu0 0.0
    %1386 = vmatpush1.msra.mxu0 0.0
    %1387 = vmatprep.subr.mxu0 0.0
    %1388 = vmatpush1.msra.mxu0 0.0
    %1389 = vmatprep.subr.mxu0 0.0
    %1390 = vmatpush1.msra.mxu0 0.0
    %1391 = vmatprep.subr.mxu0 0.0
    %1392 = vmatpush1.msra.mxu0 0.0
    %1393 = vmatprep.subr.mxu0 0.0
    %1394 = vmatpush1.msra.mxu0 0.0
    %1395 = vmatprep.subr.mxu0 0.0
    %1396 = vmatpush1.msra.mxu0 0.0
    %1397 = vmatprep.subr.mxu0 0.0
    %1398 = vmatpush1.msra.mxu0 0.0
    %1399 = vmatprep.subr.mxu0 0.0
    %1400 = vmatpush1.msra.mxu0 0.0
    %1401 = vmatprep.subr.mxu0 0.0
    %1402 = vmatpush1.msra.mxu0 0.0
    %1403 = vmatprep.subr.mxu0 0.0
    %1404 = vmatpush1.msra.mxu0 0.0
    %1405 = vmatprep.subr.mxu0 0.0
    %1406 = vmatpush1.msra.mxu0 0.0
    %1407 = vmatprep.subr.mxu0 0.0
    %1408 = vmatpush1.msra.mxu0 0.0
    %1409 = vmatprep.subr.mxu0 0.0
    %1410 = vmatpush1.msra.mxu0 0.0
    %1411 = vmatprep.subr.mxu0 0.0
    %1412 = vmatpush1.msra.mxu0 0.0
    %1413 = vmatprep.subr.mxu0 0.0
    %1414 = vmatpush1.msra.mxu0 0.0
    %1415 = vmatprep.mubr.f32.mxu0 0.0
    %v1416 = vand.u32 %v1342, 4294901760
    %v1417 = vsub.f32 %v1342, %v1416
    %v1418 = vand.u32 %v1417, 4294901760
    %v1419 = vsub.f32 %v1417, %v1418
    %v1420 = vand.u32 %v1419, 4294901760
    %1421 = vmatmul.mubr.f32.gmra.mrb[0].mxu0 %v1420
    %v1422 = vpop.f32.mrb[0].mxu0
    %v1423 = vadd.f32 %v1334, %v1422
    %v1424 = vpop.f32.mrb[0].mxu0
    %1425 = vmatprep.mubr.f32.mxu0 0.0
    %v1426 = vand.u32 %v1345, 4294901760
    %v1427 = vsub.f32 %v1345, %v1426
    %v1428 = vand.u32 %v1427, 4294901760
    %v1429 = vsub.f32 %v1427, %v1428
    %v1430 = vand.u32 %v1429, 4294901760
    %1431 = vmatmul.mubr.f32.gmra.mrb[0].mxu0 %v1430
    %v1432 = vpop.f32.mrb[0].mxu0
    %v1433 = vadd.f32 %v1339, %v1432
    %v1434 = vpop.f32.mrb[0].mxu0
    %1435 = vdwg.mxu0
    %1436 = vmatprep.subr.mxu0 0.0
    %v1437 = vand.u32 %v1323, 4294901760
    %v1438 = vsub.f32 %v1323, %v1437
    %v1439 = vand.u32 %v1438, 4294901760
    %v1440 = vsub.f32 %v1438, %v1439
    %v1441 = vand.u32 %v1440, 4294901760
    %1442 = vmatpush1.msra.mxu0 %v1441
    %1443 = vmatprep.subr.mxu0 0.0
    %v1444 = vand.u32 %v1324, 4294901760
    %v1445 = vsub.f32 %v1324, %v1444
    %v1446 = vand.u32 %v1445, 4294901760
    %v1447 = vsub.f32 %v1445, %v1446
    %v1448 = vand.u32 %v1447, 4294901760
    %1449 = vmatpush1.msra.mxu0 %v1448
    %1450 = vmatprep.subr.mxu0 0.0
    %v1451 = vand.u32 %v1325, 4294901760
    %v1452 = vsub.f32 %v1325, %v1451
    %v1453 = vand.u32 %v1452, 4294901760
    %v1454 = vsub.f32 %v1452, %v1453
    %v1455 = vand.u32 %v1454, 4294901760
    %1456 = vmatpush1.msra.mxu0 %v1455
    %1457 = vmatprep.subr.mxu0 0.0
    %v1458 = vand.u32 %v1326, 4294901760
    %v1459 = vsub.f32 %v1326, %v1458
    %v1460 = vand.u32 %v1459, 4294901760
    %v1461 = vsub.f32 %v1459, %v1460
    %v1462 = vand.u32 %v1461, 4294901760
    %1463 = vmatpush1.msra.mxu0 %v1462
    %1464 = vmatprep.subr.mxu0 0.0
    %1465 = vmatpush1.msra.mxu0 0.0
    %1466 = vmatprep.subr.mxu0 0.0
    %1467 = vmatpush1.msra.mxu0 0.0
    %1468 = vmatprep.subr.mxu0 0.0
    %1469 = vmatpush1.msra.mxu0 0.0
    %1470 = vmatprep.subr.mxu0 0.0
    %1471 = vmatpush1.msra.mxu0 0.0
    %1472 = vmatprep.subr.mxu0 0.0
    %1473 = vmatpush1.msra.mxu0 0.0
    %1474 = vmatprep.subr.mxu0 0.0
    %1475 = vmatpush1.msra.mxu0 0.0
    %1476 = vmatprep.subr.mxu0 0.0
    %1477 = vmatpush1.msra.mxu0 0.0
    %1478 = vmatprep.subr.mxu0 0.0
    %1479 = vmatpush1.msra.mxu0 0.0
    %1480 = vmatprep.subr.mxu0 0.0
    %1481 = vmatpush1.msra.mxu0 0.0
    %1482 = vmatprep.subr.mxu0 0.0
    %1483 = vmatpush1.msra.mxu0 0.0
    %1484 = vmatprep.subr.mxu0 0.0
    %1485 = vmatpush1.msra.mxu0 0.0
    %1486 = vmatprep.subr.mxu0 0.0
    %1487 = vmatpush1.msra.mxu0 0.0
    %1488 = vmatprep.subr.mxu0 0.0
    %1489 = vmatpush1.msra.mxu0 0.0
    %1490 = vmatprep.subr.mxu0 0.0
    %1491 = vmatpush1.msra.mxu0 0.0
    %1492 = vmatprep.subr.mxu0 0.0
    %1493 = vmatpush1.msra.mxu0 0.0
    %1494 = vmatprep.subr.mxu0 0.0
    %1495 = vmatpush1.msra.mxu0 0.0
    %1496 = vmatprep.subr.mxu0 0.0
    %1497 = vmatpush1.msra.mxu0 0.0
    %1498 = vmatprep.subr.mxu0 0.0
    %1499 = vmatpush1.msra.mxu0 0.0
    %1500 = vmatprep.subr.mxu0 0.0
    %1501 = vmatpush1.msra.mxu0 0.0
    %1502 = vmatprep.subr.mxu0 0.0
    %1503 = vmatpush1.msra.mxu0 0.0
    %1504 = vmatprep.subr.mxu0 0.0
    %1505 = vmatpush1.msra.mxu0 0.0
    %1506 = vmatprep.subr.mxu0 0.0
    %1507 = vmatpush1.msra.mxu0 0.0
    %1508 = vmatprep.subr.mxu0 0.0
    %1509 = vmatpush1.msra.mxu0 0.0
    %1510 = vmatprep.subr.mxu0 0.0
    %1511 = vmatpush1.msra.mxu0 0.0
    %1512 = vmatprep.subr.mxu0 0.0
    %1513 = vmatpush1.msra.mxu0 0.0
    %1514 = vmatprep.subr.mxu0 0.0
    %1515 = vmatpush1.msra.mxu0 0.0
    %1516 = vmatprep.subr.mxu0 0.0
    %1517 = vmatpush1.msra.mxu0 0.0
    %1518 = vmatprep.subr.mxu0 0.0
    %1519 = vmatpush1.msra.mxu0 0.0
    %1520 = vmatprep.mubr.f32.mxu0 0.0
    %v1521 = vand.u32 %v1342, 4294901760
    %1522 = vmatmul.mubr.f32.gmra.mrb[0].mxu0 %v1521
    %v1523 = vpop.f32.mrb[0].mxu0
    %v1524 = vadd.f32 %v1423, %v1523
    %v1525 = vpop.f32.mrb[0].mxu0
    %1526 = vmatprep.mubr.f32.mxu0 0.0
    %v1527 = vand.u32 %v1345, 4294901760
    %1528 = vmatmul.mubr.f32.gmra.mrb[0].mxu0 %v1527
    %v1529 = vpop.f32.mrb[0].mxu0
    %v1530 = vadd.f32 %v1433, %v1529
    %v1531 = vpop.f32.mrb[0].mxu0
    %1532 = vdwg.mxu0
    %1533 = vmatprep.subr.mxu0 0.0
    %v1534 = vand.u32 %v1323, 4294901760
    %v1535 = vsub.f32 %v1323, %v1534
    %1536 = vmatpush1.msra.mxu0 %v1535
    %1537 = vmatprep.subr.mxu0 0.0
    %v1538 = vand.u32 %v1324, 4294901760
    %v1539 = vsub.f32 %v1324, %v1538
    %1540 = vmatpush1.msra.mxu0 %v1539
    %1541 = vmatprep.subr.mxu0 0.0
    %v1542 = vand.u32 %v1325, 4294901760
    %v1543 = vsub.f32 %v1325, %v1542
    %1544 = vmatpush1.msra.mxu0 %v1543
    %1545 = vmatprep.subr.mxu0 0.0
    %v1546 = vand.u32 %v1326, 4294901760
    %v1547 = vsub.f32 %v1326, %v1546
    %1548 = vmatpush1.msra.mxu0 %v1547
    %1549 = vmatprep.subr.mxu0 0.0
    %1550 = vmatpush1.msra.mxu0 0.0
    %1551 = vmatprep.subr.mxu0 0.0
    %1552 = vmatpush1.msra.mxu0 0.0
    %1553 = vmatprep.subr.mxu0 0.0
    %1554 = vmatpush1.msra.mxu0 0.0
    %1555 = vmatprep.subr.mxu0 0.0
    %1556 = vmatpush1.msra.mxu0 0.0
    %1557 = vmatprep.subr.mxu0 0.0
    %1558 = vmatpush1.msra.mxu0 0.0
    %1559 = vmatprep.subr.mxu0 0.0
    %1560 = vmatpush1.msra.mxu0 0.0
    %1561 = vmatprep.subr.mxu0 0.0
    %1562 = vmatpush1.msra.mxu0 0.0
    %1563 = vmatprep.subr.mxu0 0.0
    %1564 = vmatpush1.msra.mxu0 0.0
    %1565 = vmatprep.subr.mxu0 0.0
    %1566 = vmatpush1.msra.mxu0 0.0
    %1567 = vmatprep.subr.mxu0 0.0
    %1568 = vmatpush1.msra.mxu0 0.0
    %1569 = vmatprep.subr.mxu0 0.0
    %1570 = vmatpush1.msra.mxu0 0.0
    %1571 = vmatprep.subr.mxu0 0.0
    %1572 = vmatpush1.msra.mxu0 0.0
    %1573 = vmatprep.subr.mxu0 0.0
    %1574 = vmatpush1.msra.mxu0 0.0
    %1575 = vmatprep.subr.mxu0 0.0
    %1576 = vmatpush1.msra.mxu0 0.0
    %1577 = vmatprep.subr.mxu0 0.0
    %1578 = vmatpush1.msra.mxu0 0.0
    %1579 = vmatprep.subr.mxu0 0.0
    %1580 = vmatpush1.msra.mxu0 0.0
    %1581 = vmatprep.subr.mxu0 0.0
    %1582 = vmatpush1.msra.mxu0 0.0
    %1583 = vmatprep.subr.mxu0 0.0
    %1584 = vmatpush1.msra.mxu0 0.0
    %1585 = vmatprep.subr.mxu0 0.0
    %1586 = vmatpush1.msra.mxu0 0.0
    %1587 = vmatprep.subr.mxu0 0.0
    %1588 = vmatpush1.msra.mxu0 0.0
    %1589 = vmatprep.subr.mxu0 0.0
    %1590 = vmatpush1.msra.mxu0 0.0
    %1591 = vmatprep.subr.mxu0 0.0
    %1592 = vmatpush1.msra.mxu0 0.0
    %1593 = vmatprep.subr.mxu0 0.0
    %1594 = vmatpush1.msra.mxu0 0.0
    %1595 = vmatprep.subr.mxu0 0.0
    %1596 = vmatpush1.msra.mxu0 0.0
    %1597 = vmatprep.subr.mxu0 0.0
    %1598 = vmatpush1.msra.mxu0 0.0
    %1599 = vmatprep.subr.mxu0 0.0
    %1600 = vmatpush1.msra.mxu0 0.0
    %1601 = vmatprep.subr.mxu0 0.0
    %1602 = vmatpush1.msra.mxu0 0.0
    %1603 = vmatprep.subr.mxu0 0.0
    %1604 = vmatpush1.msra.mxu0 0.0
    %1605 = vmatprep.mubr.f32.mxu0 0.0
    %v1606 = vand.u32 %v1342, 4294901760
    %v1607 = vsub.f32 %v1342, %v1606
    %1608 = vmatmul.mubr.f32.gmra.mrb[0].mxu0 %v1607
    %v1609 = vpop.f32.mrb[0].mxu0
    %v1610 = vadd.f32 %v1524, %v1609
    %v1611 = vpop.f32.mrb[0].mxu0
    %1612 = vmatprep.mubr.f32.mxu0 0.0
    %v1613 = vand.u32 %v1345, 4294901760
    %v1614 = vsub.f32 %v1345, %v1613
    %1615 = vmatmul.mubr.f32.gmra.mrb[0].mxu0 %v1614
    %v1616 = vpop.f32.mrb[0].mxu0
    %v1617 = vadd.f32 %v1530, %v1616
    %v1618 = vpop.f32.mrb[0].mxu0
    %1619 = vdwg.mxu0
    %1620 = vmatprep.subr.mxu0 0.0
    %v1621 = vand.u32 %v1323, 4294901760
    %1622 = vmatpush1.msra.mxu0 %v1621
    %1623 = vmatprep.subr.mxu0 0.0
    %v1624 = vand.u32 %v1324, 4294901760
    %1625 = vmatpush1.msra.mxu0 %v1624
    %1626 = vmatprep.subr.mxu0 0.0
    %v1627 = vand.u32 %v1325, 4294901760
    %1628 = vmatpush1.msra.mxu0 %v1627
    %1629 = vmatprep.subr.mxu0 0.0
    %v1630 = vand.u32 %v1326, 4294901760
    %1631 = vmatpush1.msra.mxu0 %v1630
    %1632 = vmatprep.subr.mxu0 0.0
    %1633 = vmatpush1.msra.mxu0 0.0
    %1634 = vmatprep.subr.mxu0 0.0
    %1635 = vmatpush1.msra.mxu0 0.0
    %1636 = vmatprep.subr.mxu0 0.0
    %1637 = vmatpush1.msra.mxu0 0.0
    %1638 = vmatprep.subr.mxu0 0.0
    %1639 = vmatpush1.msra.mxu0 0.0
    %1640 = vmatprep.subr.mxu0 0.0
    %1641 = vmatpush1.msra.mxu0 0.0
    %1642 = vmatprep.subr.mxu0 0.0
    %1643 = vmatpush1.msra.mxu0 0.0
    %1644 = vmatprep.subr.mxu0 0.0
    %1645 = vmatpush1.msra.mxu0 0.0
    %1646 = vmatprep.subr.mxu0 0.0
    %1647 = vmatpush1.msra.mxu0 0.0
    %1648 = vmatprep.subr.mxu0 0.0
    %1649 = vmatpush1.msra.mxu0 0.0
    %1650 = vmatprep.subr.mxu0 0.0
    %1651 = vmatpush1.msra.mxu0 0.0
    %1652 = vmatprep.subr.mxu0 0.0
    %1653 = vmatpush1.msra.mxu0 0.0
    %1654 = vmatprep.subr.mxu0 0.0
    %1655 = vmatpush1.msra.mxu0 0.0
    %1656 = vmatprep.subr.mxu0 0.0
    %1657 = vmatpush1.msra.mxu0 0.0
    %1658 = vmatprep.subr.mxu0 0.0
    %1659 = vmatpush1.msra.mxu0 0.0
    %1660 = vmatprep.subr.mxu0 0.0
    %1661 = vmatpush1.msra.mxu0 0.0
    %1662 = vmatprep.subr.mxu0 0.0
    %1663 = vmatpush1.msra.mxu0 0.0
    %1664 = vmatprep.subr.mxu0 0.0
    %1665 = vmatpush1.msra.mxu0 0.0
    %1666 = vmatprep.subr.mxu0 0.0
    %1667 = vmatpush1.msra.mxu0 0.0
    %1668 = vmatprep.subr.mxu0 0.0
    %1669 = vmatpush1.msra.mxu0 0.0
    %1670 = vmatprep.subr.mxu0 0.0
    %1671 = vmatpush1.msra.mxu0 0.0
    %1672 = vmatprep.subr.mxu0 0.0
    %1673 = vmatpush1.msra.mxu0 0.0
    %1674 = vmatprep.subr.mxu0 0.0
    %1675 = vmatpush1.msra.mxu0 0.0
    %1676 = vmatprep.subr.mxu0 0.0
    %1677 = vmatpush1.msra.mxu0 0.0
    %1678 = vmatprep.subr.mxu0 0.0
    %1679 = vmatpush1.msra.mxu0 0.0
    %1680 = vmatprep.subr.mxu0 0.0
    %1681 = vmatpush1.msra.mxu0 0.0
    %1682 = vmatprep.subr.mxu0 0.0
    %1683 = vmatpush1.msra.mxu0 0.0
    %1684 = vmatprep.subr.mxu0 0.0
    %1685 = vmatpush1.msra.mxu0 0.0
    %1686 = vmatprep.subr.mxu0 0.0
    %1687 = vmatpush1.msra.mxu0 0.0
    %1688 = vmatprep.mubr.f32.mxu0 0.0
    %v1689 = vand.u32 %v1342, 4294901760
    %v1690 = vsub.f32 %v1342, %v1689
    %v1691 = vand.u32 %v1690, 4294901760
    %1692 = vmatmul.mubr.f32.gmra.mrb[0].mxu0 %v1691
    %v1693 = vpop.f32.mrb[0].mxu0
    %v1694 = vadd.f32 %v1610, %v1693
    %v1695 = vpop.f32.mrb[0].mxu0
    %1696 = vmatprep.mubr.f32.mxu0 0.0
    %v1697 = vand.u32 %v1345, 4294901760
    %v1698 = vsub.f32 %v1345, %v1697
    %v1699 = vand.u32 %v1698, 4294901760
    %1700 = vmatmul.mubr.f32.gmra.mrb[0].mxu0 %v1699
    %v1701 = vpop.f32.mrb[0].mxu0
    %v1702 = vadd.f32 %v1617, %v1701
    %v1703 = vpop.f32.mrb[0].mxu0
    %1704 = vdwg.mxu0
    %1705 = vmatprep.subr.mxu0 0.0
    %v1706 = vand.u32 %v1323, 4294901760
    %v1707 = vsub.f32 %v1323, %v1706
    %v1708 = vand.u32 %v1707, 4294901760
    %1709 = vmatpush1.msra.mxu0 %v1708
    %1710 = vmatprep.subr.mxu0 0.0
    %v1711 = vand.u32 %v1324, 4294901760
    %v1712 = vsub.f32 %v1324, %v1711
    %v1713 = vand.u32 %v1712, 4294901760
    %1714 = vmatpush1.msra.mxu0 %v1713
    %1715 = vmatprep.subr.mxu0 0.0
    %v1716 = vand.u32 %v1325, 4294901760
    %v1717 = vsub.f32 %v1325, %v1716
    %v1718 = vand.u32 %v1717, 4294901760
    %1719 = vmatpush1.msra.mxu0 %v1718
    %1720 = vmatprep.subr.mxu0 0.0
    %v1721 = vand.u32 %v1326, 4294901760
    %v1722 = vsub.f32 %v1326, %v1721
    %v1723 = vand.u32 %v1722, 4294901760
    %1724 = vmatpush1.msra.mxu0 %v1723
    %1725 = vmatprep.subr.mxu0 0.0
    %1726 = vmatpush1.msra.mxu0 0.0
    %1727 = vmatprep.subr.mxu0 0.0
    %1728 = vmatpush1.msra.mxu0 0.0
    %1729 = vmatprep.subr.mxu0 0.0
    %1730 = vmatpush1.msra.mxu0 0.0
    %1731 = vmatprep.subr.mxu0 0.0
    %1732 = vmatpush1.msra.mxu0 0.0
    %1733 = vmatprep.subr.mxu0 0.0
    %1734 = vmatpush1.msra.mxu0 0.0
    %1735 = vmatprep.subr.mxu0 0.0
    %1736 = vmatpush1.msra.mxu0 0.0
    %1737 = vmatprep.subr.mxu0 0.0
    %1738 = vmatpush1.msra.mxu0 0.0
    %1739 = vmatprep.subr.mxu0 0.0
    %1740 = vmatpush1.msra.mxu0 0.0
    %1741 = vmatprep.subr.mxu0 0.0
    %1742 = vmatpush1.msra.mxu0 0.0
    %1743 = vmatprep.subr.mxu0 0.0
    %1744 = vmatpush1.msra.mxu0 0.0
    %1745 = vmatprep.subr.mxu0 0.0
    %1746 = vmatpush1.msra.mxu0 0.0
    %1747 = vmatprep.subr.mxu0 0.0
    %1748 = vmatpush1.msra.mxu0 0.0
    %1749 = vmatprep.subr.mxu0 0.0
    %1750 = vmatpush1.msra.mxu0 0.0
    %1751 = vmatprep.subr.mxu0 0.0
    %1752 = vmatpush1.msra.mxu0 0.0
    %1753 = vmatprep.subr.mxu0 0.0
    %1754 = vmatpush1.msra.mxu0 0.0
    %1755 = vmatprep.subr.mxu0 0.0
    %1756 = vmatpush1.msra.mxu0 0.0
    %1757 = vmatprep.subr.mxu0 0.0
    %1758 = vmatpush1.msra.mxu0 0.0
    %1759 = vmatprep.subr.mxu0 0.0
    %1760 = vmatpush1.msra.mxu0 0.0
    %1761 = vmatprep.subr.mxu0 0.0
    %1762 = vmatpush1.msra.mxu0 0.0
    %1763 = vmatprep.subr.mxu0 0.0
    %1764 = vmatpush1.msra.mxu0 0.0
    %1765 = vmatprep.subr.mxu0 0.0
    %1766 = vmatpush1.msra.mxu0 0.0
    %1767 = vmatprep.subr.mxu0 0.0
    %1768 = vmatpush1.msra.mxu0 0.0
    %1769 = vmatprep.subr.mxu0 0.0
    %1770 = vmatpush1.msra.mxu0 0.0
    %1771 = vmatprep.subr.mxu0 0.0
    %1772 = vmatpush1.msra.mxu0 0.0
    %1773 = vmatprep.subr.mxu0 0.0
    %1774 = vmatpush1.msra.mxu0 0.0
    %1775 = vmatprep.subr.mxu0 0.0
    %1776 = vmatpush1.msra.mxu0 0.0
    %1777 = vmatprep.subr.mxu0 0.0
    %1778 = vmatpush1.msra.mxu0 0.0
    %1779 = vmatprep.subr.mxu0 0.0
    %1780 = vmatpush1.msra.mxu0 0.0
    %1781 = vmatprep.mubr.f32.mxu0 0.0
    %v1782 = vand.u32 %v1342, 4294901760
    %1783 = vmatmul.mubr.f32.gmra.mrb[0].mxu0 %v1782
    %v1784 = vpop.f32.mrb[0].mxu0
    %v1785 = vadd.f32 %v1694, %v1784
    %v1786 = vpop.f32.mrb[0].mxu0
    %1787 = vmatprep.mubr.f32.mxu0 0.0
    %v1788 = vand.u32 %v1345, 4294901760
    %1789 = vmatmul.mubr.f32.gmra.mrb[0].mxu0 %v1788
    %v1790 = vpop.f32.mrb[0].mxu0
    %v1791 = vadd.f32 %v1702, %v1790
    %v1792 = vpop.f32.mrb[0].mxu0
    %1793 = vdwg.mxu0
    %1794 = vmatprep.subr.mxu0 0.0
    %v1795 = vand.u32 %v1323, 4294901760
    %1796 = vmatpush1.msra.mxu0 %v1795
    %1797 = vmatprep.subr.mxu0 0.0
    %v1798 = vand.u32 %v1324, 4294901760
    %1799 = vmatpush1.msra.mxu0 %v1798
    %1800 = vmatprep.subr.mxu0 0.0
    %v1801 = vand.u32 %v1325, 4294901760
    %1802 = vmatpush1.msra.mxu0 %v1801
    %1803 = vmatprep.subr.mxu0 0.0
    %v1804 = vand.u32 %v1326, 4294901760
    %1805 = vmatpush1.msra.mxu0 %v1804
    %1806 = vmatprep.subr.mxu0 0.0
    %1807 = vmatpush1.msra.mxu0 0.0
    %1808 = vmatprep.subr.mxu0 0.0
    %1809 = vmatpush1.msra.mxu0 0.0
    %1810 = vmatprep.subr.mxu0 0.0
    %1811 = vmatpush1.msra.mxu0 0.0
    %1812 = vmatprep.subr.mxu0 0.0
    %1813 = vmatpush1.msra.mxu0 0.0
    %1814 = vmatprep.subr.mxu0 0.0
    %1815 = vmatpush1.msra.mxu0 0.0
    %1816 = vmatprep.subr.mxu0 0.0
    %1817 = vmatpush1.msra.mxu0 0.0
    %1818 = vmatprep.subr.mxu0 0.0
    %1819 = vmatpush1.msra.mxu0 0.0
    %1820 = vmatprep.subr.mxu0 0.0
    %1821 = vmatpush1.msra.mxu0 0.0
    %1822 = vmatprep.subr.mxu0 0.0
    %1823 = vmatpush1.msra.mxu0 0.0
    %1824 = vmatprep.subr.mxu0 0.0
    %1825 = vmatpush1.msra.mxu0 0.0
    %1826 = vmatprep.subr.mxu0 0.0
    %1827 = vmatpush1.msra.mxu0 0.0
    %1828 = vmatprep.subr.mxu0 0.0
    %1829 = vmatpush1.msra.mxu0 0.0
    %1830 = vmatprep.subr.mxu0 0.0
    %1831 = vmatpush1.msra.mxu0 0.0
    %1832 = vmatprep.subr.mxu0 0.0
    %1833 = vmatpush1.msra.mxu0 0.0
    %1834 = vmatprep.subr.mxu0 0.0
    %1835 = vmatpush1.msra.mxu0 0.0
    %1836 = vmatprep.subr.mxu0 0.0
    %1837 = vmatpush1.msra.mxu0 0.0
    %1838 = vmatprep.subr.mxu0 0.0
    %1839 = vmatpush1.msra.mxu0 0.0
    %1840 = vmatprep.subr.mxu0 0.0
    %1841 = vmatpush1.msra.mxu0 0.0
    %1842 = vmatprep.subr.mxu0 0.0
    %1843 = vmatpush1.msra.mxu0 0.0
    %1844 = vmatprep.subr.mxu0 0.0
    %1845 = vmatpush1.msra.mxu0 0.0
    %1846 = vmatprep.subr.mxu0 0.0
    %1847 = vmatpush1.msra.mxu0 0.0
    %1848 = vmatprep.subr.mxu0 0.0
    %1849 = vmatpush1.msra.mxu0 0.0
    %1850 = vmatprep.subr.mxu0 0.0
    %1851 = vmatpush1.msra.mxu0 0.0
    %1852 = vmatprep.subr.mxu0 0.0
    %1853 = vmatpush1.msra.mxu0 0.0
    %1854 = vmatprep.subr.mxu0 0.0
    %1855 = vmatpush1.msra.mxu0 0.0
    %1856 = vmatprep.subr.mxu0 0.0
    %1857 = vmatpush1.msra.mxu0 0.0
    %1858 = vmatprep.subr.mxu0 0.0
    %1859 = vmatpush1.msra.mxu0 0.0
    %1860 = vmatprep.subr.mxu0 0.0
    %1861 = vmatpush1.msra.mxu0 0.0
    %1862 = vmatprep.mubr.f32.mxu0 0.0
    %v1863 = vand.u32 %v1342, 4294901760
    %1864 = vmatmul.mubr.f32.gmra.mrb[0].mxu0 %v1863
    %v1865 = vpop.f32.mrb[0].mxu0
    %v1866 = vadd.f32 %v1785, %v1865
    %v1867 = vpop.f32.mrb[0].mxu0
    %1868 = vmatprep.mubr.f32.mxu0 0.0
    %v1869 = vand.u32 %v1345, 4294901760
    %1870 = vmatmul.mubr.f32.gmra.mrb[0].mxu0 %v1869
    %v1871 = vpop.f32.mrb[0].mxu0
    %v1872 = vadd.f32 %v1791, %v1871
    %v1873 = vpop.f32.mrb[0].mxu0
    %1874 = vdwg.mxu0
    %v1875 = vxor.u32 %v1866, 2147483648
    %v1876 = vxor.u32 %v1872, 2147483648
    %v1877 = vmul.f32 %v1875, 1.442695
    %v1878 = vpow.pop %v1877
    %v1879 = vmul.f32 %v1876, 1.442695
    %v1880 = vpow.pop %v1879
    %v1881 = vadd.f32 %v1878, 1.0
    %v1882 = vadd.f32 %v1880, 1.0
    %v1883 = vrcp.pop %v1881
    %v1884 = vmul.f32 1.0, %v1883
    %v1885 = vrcp.pop %v1882
    %v1886 = vmul.f32 1.0, %v1885
    %v1887 = vld [vmem:[%s7] sm:$0xff]
    %v1888 = vld [vmem:[%s8] sm:$0xff]
    %1890 = vset.pattern.permute.xlu0 0
    %1891 = vperm.xlu0 %1890, %v1888
    %v1892 = vpop.permute.xlu0 %1891
    %v1895 = vsel %vm63, %v1887, 0
    %1897 = vmatprep.subr.mxu0 0.0
    %v1898 = vand.u32 %v1884, 4294901760
    %1899 = vmatpush1.msra.mxu0 %v1898
    %1900 = vmatprep.subr.mxu0 0.0
    %v1901 = vand.u32 %v1886, 4294901760
    %1902 = vmatpush1.msra.mxu0 %v1901
    %1903 = vmatprep.subr.mxu0 0.0
    %1904 = vmatpush1.msra.mxu0 0.0
    %1905 = vmatprep.subr.mxu0 0.0
    %1906 = vmatpush1.msra.mxu0 0.0
    %1907 = vmatprep.subr.mxu0 0.0
    %1908 = vmatpush1.msra.mxu0 0.0
    %1909 = vmatprep.subr.mxu0 0.0
    %1910 = vmatpush1.msra.mxu0 0.0
    %1911 = vmatprep.subr.mxu0 0.0
    %1912 = vmatpush1.msra.mxu0 0.0
    %1913 = vmatprep.subr.mxu0 0.0
    %1914 = vmatpush1.msra.mxu0 0.0
    %1915 = vmatprep.subr.mxu0 0.0
    %1916 = vmatpush1.msra.mxu0 0.0
    %1917 = vmatprep.subr.mxu0 0.0
    %1918 = vmatpush1.msra.mxu0 0.0
    %1919 = vmatprep.subr.mxu0 0.0
    %1920 = vmatpush1.msra.mxu0 0.0
    %1921 = vmatprep.subr.mxu0 0.0
    %1922 = vmatpush1.msra.mxu0 0.0
    %1923 = vmatprep.subr.mxu0 0.0
    %1924 = vmatpush1.msra.mxu0 0.0
    %1925 = vmatprep.subr.mxu0 0.0
    %1926 = vmatpush1.msra.mxu0 0.0
    %1927 = vmatprep.subr.mxu0 0.0
    %1928 = vmatpush1.msra.mxu0 0.0
    %1929 = vmatprep.subr.mxu0 0.0
    %1930 = vmatpush1.msra.mxu0 0.0
    %1931 = vmatprep.subr.mxu0 0.0
    %1932 = vmatpush1.msra.mxu0 0.0
    %1933 = vmatprep.subr.mxu0 0.0
    %1934 = vmatpush1.msra.mxu0 0.0
    %1935 = vmatprep.subr.mxu0 0.0
    %1936 = vmatpush1.msra.mxu0 0.0
    %1937 = vmatprep.subr.mxu0 0.0
    %1938 = vmatpush1.msra.mxu0 0.0
    %1939 = vmatprep.subr.mxu0 0.0
    %1940 = vmatpush1.msra.mxu0 0.0
    %1941 = vmatprep.subr.mxu0 0.0
    %1942 = vmatpush1.msra.mxu0 0.0
    %1943 = vmatprep.subr.mxu0 0.0
    %1944 = vmatpush1.msra.mxu0 0.0
    %1945 = vmatprep.subr.mxu0 0.0
    %1946 = vmatpush1.msra.mxu0 0.0
    %1947 = vmatprep.subr.mxu0 0.0
    %1948 = vmatpush1.msra.mxu0 0.0
    %1949 = vmatprep.subr.mxu0 0.0
    %1950 = vmatpush1.msra.mxu0 0.0
    %1951 = vmatprep.subr.mxu0 0.0
    %1952 = vmatpush1.msra.mxu0 0.0
    %1953 = vmatprep.subr.mxu0 0.0
    %1954 = vmatpush1.msra.mxu0 0.0
    %1955 = vmatprep.subr.mxu0 0.0
    %1956 = vmatpush1.msra.mxu0 0.0
    %1957 = vmatprep.subr.mxu0 0.0
    %1958 = vmatpush1.msra.mxu0 0.0
    %1959 = vmatprep.subr.mxu0 0.0
    %1960 = vmatpush1.msra.mxu0 0.0
    %1961 = vmatprep.subr.mxu0 0.0
    %1962 = vmatpush1.msra.mxu0 0.0
    %1963 = vmatprep.mubr.f32.mxu0 0.0
    %v1964 = vand.u32 %v1895, 4294901760
    %v1965 = vsub.f32 %v1895, %v1964
    %v1966 = vand.u32 %v1965, 4294901760
    %v1967 = vsub.f32 %v1965, %v1966
    %v1968 = vand.u32 %v1967, 4294901760
    %1969 = vmatmul.mubr.f32.gmra.mrb[0].mxu0 %v1968
    %v1970 = vpop.f32.mrb[0].mxu0
    %v1971 = vadd.f32 %v1892, %v1970
    %v1972 = vpop.f32.mrb[0].mxu0
    %1973 = vdwg.mxu0
    %1974 = vmatprep.subr.mxu0 0.0
    %v1975 = vand.u32 %v1884, 4294901760
    %v1976 = vsub.f32 %v1884, %v1975
    %v1977 = vand.u32 %v1976, 4294901760
    %v1978 = vsub.f32 %v1976, %v1977
    %v1979 = vand.u32 %v1978, 4294901760
    %1980 = vmatpush1.msra.mxu0 %v1979
    %1981 = vmatprep.subr.mxu0 0.0
    %v1982 = vand.u32 %v1886, 4294901760
    %v1983 = vsub.f32 %v1886, %v1982
    %v1984 = vand.u32 %v1983, 4294901760
    %v1985 = vsub.f32 %v1983, %v1984
    %v1986 = vand.u32 %v1985, 4294901760
    %1987 = vmatpush1.msra.mxu0 %v1986
    %1988 = vmatprep.subr.mxu0 0.0
    %1989 = vmatpush1.msra.mxu0 0.0
    %1990 = vmatprep.subr.mxu0 0.0
    %1991 = vmatpush1.msra.mxu0 0.0
    %1992 = vmatprep.subr.mxu0 0.0
    %1993 = vmatpush1.msra.mxu0 0.0
    %1994 = vmatprep.subr.mxu0 0.0
    %1995 = vmatpush1.msra.mxu0 0.0
    %1996 = vmatprep.subr.mxu0 0.0
    %1997 = vmatpush1.msra.mxu0 0.0
    %1998 = vmatprep.subr.mxu0 0.0
    %1999 = vmatpush1.msra.mxu0 0.0
    %2000 = vmatprep.subr.mxu0 0.0
    %2001 = vmatpush1.msra.mxu0 0.0
    %2002 = vmatprep.subr.mxu0 0.0
    %2003 = vmatpush1.msra.mxu0 0.0
    %2004 = vmatprep.subr.mxu0 0.0
    %2005 = vmatpush1.msra.mxu0 0.0
    %2006 = vmatprep.subr.mxu0 0.0
    %2007 = vmatpush1.msra.mxu0 0.0
    %2008 = vmatprep.subr.mxu0 0.0
    %2009 = vmatpush1.msra.mxu0 0.0
    %2010 = vmatprep.subr.mxu0 0.0
    %2011 = vmatpush1.msra.mxu0 0.0
    %2012 = vmatprep.subr.mxu0 0.0
    %2013 = vmatpush1.msra.mxu0 0.0
    %2014 = vmatprep.subr.mxu0 0.0
    %2015 = vmatpush1.msra.mxu0 0.0
    %2016 = vmatprep.subr.mxu0 0.0
    %2017 = vmatpush1.msra.mxu0 0.0
    %2018 = vmatprep.subr.mxu0 0.0
    %2019 = vmatpush1.msra.mxu0 0.0
    %2020 = vmatprep.subr.mxu0 0.0
    %2021 = vmatpush1.msra.mxu0 0.0
    %2022 = vmatprep.subr.mxu0 0.0
    %2023 = vmatpush1.msra.mxu0 0.0
    %2024 = vmatprep.subr.mxu0 0.0
    %2025 = vmatpush1.msra.mxu0 0.0
    %2026 = vmatprep.subr.mxu0 0.0
    %2027 = vmatpush1.msra.mxu0 0.0
    %2028 = vmatprep.subr.mxu0 0.0
    %2029 = vmatpush1.msra.mxu0 0.0
    %2030 = vmatprep.subr.mxu0 0.0
    %2031 = vmatpush1.msra.mxu0 0.0
    %2032 = vmatprep.subr.mxu0 0.0
    %2033 = vmatpush1.msra.mxu0 0.0
    %2034 = vmatprep.subr.mxu0 0.0
    %2035 = vmatpush1.msra.mxu0 0.0
    %2036 = vmatprep.subr.mxu0 0.0
    %2037 = vmatpush1.msra.mxu0 0.0
    %2038 = vmatprep.subr.mxu0 0.0
    %2039 = vmatpush1.msra.mxu0 0.0
    %2040 = vmatprep.subr.mxu0 0.0
    %2041 = vmatpush1.msra.mxu0 0.0
    %2042 = vmatprep.subr.mxu0 0.0
    %2043 = vmatpush1.msra.mxu0 0.0
    %2044 = vmatprep.subr.mxu0 0.0
    %2045 = vmatpush1.msra.mxu0 0.0
    %2046 = vmatprep.subr.mxu0 0.0
    %2047 = vmatpush1.msra.mxu0 0.0
    %2048 = vmatprep.mubr.f32.mxu0 0.0
    %v2049 = vand.u32 %v1895, 4294901760
    %2050 = vmatmul.mubr.f32.gmra.mrb[0].mxu0 %v2049
    %v2051 = vpop.f32.mrb[0].mxu0
    %v2052 = vadd.f32 %v1971, %v2051
    %v2053 = vpop.f32.mrb[0].mxu0
    %2054 = vdwg.mxu0
    %2055 = vmatprep.subr.mxu0 0.0
    %v2056 = vand.u32 %v1884, 4294901760
    %v2057 = vsub.f32 %v1884, %v2056
    %2058 = vmatpush1.msra.mxu0 %v2057
    %2059 = vmatprep.subr.mxu0 0.0
    %v2060 = vand.u32 %v1886, 4294901760
    %v2061 = vsub.f32 %v1886, %v2060
    %2062 = vmatpush1.msra.mxu0 %v2061
    %2063 = vmatprep.subr.mxu0 0.0
    %2064 = vmatpush1.msra.mxu0 0.0
    %2065 = vmatprep.subr.mxu0 0.0
    %2066 = vmatpush1.msra.mxu0 0.0
    %2067 = vmatprep.subr.mxu0 0.0
    %2068 = vmatpush1.msra.mxu0 0.0
    %2069 = vmatprep.subr.mxu0 0.0
    %2070 = vmatpush1.msra.mxu0 0.0
    %2071 = vmatprep.subr.mxu0 0.0
    %2072 = vmatpush1.msra.mxu0 0.0
    %2073 = vmatprep.subr.mxu0 0.0
    %2074 = vmatpush1.msra.mxu0 0.0
    %2075 = vmatprep.subr.mxu0 0.0
    %2076 = vmatpush1.msra.mxu0 0.0
    %2077 = vmatprep.subr.mxu0 0.0
    %2078 = vmatpush1.msra.mxu0 0.0
    %2079 = vmatprep.subr.mxu0 0.0
    %2080 = vmatpush1.msra.mxu0 0.0
    %2081 = vmatprep.subr.mxu0 0.0
    %2082 = vmatpush1.msra.mxu0 0.0
    %2083 = vmatprep.subr.mxu0 0.0
    %2084 = vmatpush1.msra.mxu0 0.0
    %2085 = vmatprep.subr.mxu0 0.0
    %2086 = vmatpush1.msra.mxu0 0.0
    %2087 = vmatprep.subr.mxu0 0.0
    %2088 = vmatpush1.msra.mxu0 0.0
    %2089 = vmatprep.subr.mxu0 0.0
    %2090 = vmatpush1.msra.mxu0 0.0
    %2091 = vmatprep.subr.mxu0 0.0
    %2092 = vmatpush1.msra.mxu0 0.0
    %2093 = vmatprep.subr.mxu0 0.0
    %2094 = vmatpush1.msra.mxu0 0.0
    %2095 = vmatprep.subr.mxu0 0.0
    %2096 = vmatpush1.msra.mxu0 0.0
    %2097 = vmatprep.subr.mxu0 0.0
    %2098 = vmatpush1.msra.mxu0 0.0
    %2099 = vmatprep.subr.mxu0 0.0
    %2100 = vmatpush1.msra.mxu0 0.0
    %2101 = vmatprep.subr.mxu0 0.0
    %2102 = vmatpush1.msra.mxu0 0.0
    %2103 = vmatprep.subr.mxu0 0.0
    %2104 = vmatpush1.msra.mxu0 0.0
    %2105 = vmatprep.subr.mxu0 0.0
    %2106 = vmatpush1.msra.mxu0 0.0
    %2107 = vmatprep.subr.mxu0 0.0
    %2108 = vmatpush1.msra.mxu0 0.0
    %2109 = vmatprep.subr.mxu0 0.0
    %2110 = vmatpush1.msra.mxu0 0.0
    %2111 = vmatprep.subr.mxu0 0.0
    %2112 = vmatpush1.msra.mxu0 0.0
    %2113 = vmatprep.subr.mxu0 0.0
    %2114 = vmatpush1.msra.mxu0 0.0
    %2115 = vmatprep.subr.mxu0 0.0
    %2116 = vmatpush1.msra.mxu0 0.0
    %2117 = vmatprep.subr.mxu0 0.0
    %2118 = vmatpush1.msra.mxu0 0.0
    %2119 = vmatprep.subr.mxu0 0.0
    %2120 = vmatpush1.msra.mxu0 0.0
    %2121 = vmatprep.subr.mxu0 0.0
    %2122 = vmatpush1.msra.mxu0 0.0
    %2123 = vmatprep.mubr.f32.mxu0 0.0
    %v2124 = vand.u32 %v1895, 4294901760
    %v2125 = vsub.f32 %v1895, %v2124
    %2126 = vmatmul.mubr.f32.gmra.mrb[0].mxu0 %v2125
    %v2127 = vpop.f32.mrb[0].mxu0
    %v2128 = vadd.f32 %v2052, %v2127
    %v2129 = vpop.f32.mrb[0].mxu0
    %2130 = vdwg.mxu0
    %2131 = vmatprep.subr.mxu0 0.0
    %v2132 = vand.u32 %v1884, 4294901760
    %2133 = vmatpush1.msra.mxu0 %v2132
    %2134 = vmatprep.subr.mxu0 0.0
    %v2135 = vand.u32 %v1886, 4294901760
    %2136 = vmatpush1.msra.mxu0 %v2135
    %2137 = vmatprep.subr.mxu0 0.0
    %2138 = vmatpush1.msra.mxu0 0.0
    %2139 = vmatprep.subr.mxu0 0.0
    %2140 = vmatpush1.msra.mxu0 0.0
    %2141 = vmatprep.subr.mxu0 0.0
    %2142 = vmatpush1.msra.mxu0 0.0
    %2143 = vmatprep.subr.mxu0 0.0
    %2144 = vmatpush1.msra.mxu0 0.0
    %2145 = vmatprep.subr.mxu0 0.0
    %2146 = vmatpush1.msra.mxu0 0.0
    %2147 = vmatprep.subr.mxu0 0.0
    %2148 = vmatpush1.msra.mxu0 0.0
    %2149 = vmatprep.subr.mxu0 0.0
    %2150 = vmatpush1.msra.mxu0 0.0
    %2151 = vmatprep.subr.mxu0 0.0
    %2152 = vmatpush1.msra.mxu0 0.0
    %2153 = vmatprep.subr.mxu0 0.0
    %2154 = vmatpush1.msra.mxu0 0.0
    %2155 = vmatprep.subr.mxu0 0.0
    %2156 = vmatpush1.msra.mxu0 0.0
    %2157 = vmatprep.subr.mxu0 0.0
    %2158 = vmatpush1.msra.mxu0 0.0
    %2159 = vmatprep.subr.mxu0 0.0
    %2160 = vmatpush1.msra.mxu0 0.0
    %2161 = vmatprep.subr.mxu0 0.0
    %2162 = vmatpush1.msra.mxu0 0.0
    %2163 = vmatprep.subr.mxu0 0.0
    %2164 = vmatpush1.msra.mxu0 0.0
    %2165 = vmatprep.subr.mxu0 0.0
    %2166 = vmatpush1.msra.mxu0 0.0
    %2167 = vmatprep.subr.mxu0 0.0
    %2168 = vmatpush1.msra.mxu0 0.0
    %2169 = vmatprep.subr.mxu0 0.0
    %2170 = vmatpush1.msra.mxu0 0.0
    %2171 = vmatprep.subr.mxu0 0.0
    %2172 = vmatpush1.msra.mxu0 0.0
    %2173 = vmatprep.subr.mxu0 0.0
    %2174 = vmatpush1.msra.mxu0 0.0
    %2175 = vmatprep.subr.mxu0 0.0
    %2176 = vmatpush1.msra.mxu0 0.0
    %2177 = vmatprep.subr.mxu0 0.0
    %2178 = vmatpush1.msra.mxu0 0.0
    %2179 = vmatprep.subr.mxu0 0.0
    %2180 = vmatpush1.msra.mxu0 0.0
    %2181 = vmatprep.subr.mxu0 0.0
    %2182 = vmatpush1.msra.mxu0 0.0
    %2183 = vmatprep.subr.mxu0 0.0
    %2184 = vmatpush1.msra.mxu0 0.0
    %2185 = vmatprep.subr.mxu0 0.0
    %2186 = vmatpush1.msra.mxu0 0.0
    %2187 = vmatprep.subr.mxu0 0.0
    %2188 = vmatpush1.msra.mxu0 0.0
    %2189 = vmatprep.subr.mxu0 0.0
    %2190 = vmatpush1.msra.mxu0 0.0
    %2191 = vmatprep.subr.mxu0 0.0
    %2192 = vmatpush1.msra.mxu0 0.0
    %2193 = vmatprep.subr.mxu0 0.0
    %2194 = vmatpush1.msra.mxu0 0.0
    %2195 = vmatprep.subr.mxu0 0.0
    %2196 = vmatpush1.msra.mxu0 0.0
    %2197 = vmatprep.mubr.f32.mxu0 0.0
    %v2198 = vand.u32 %v1895, 4294901760
    %v2199 = vsub.f32 %v1895, %v2198
    %v2200 = vand.u32 %v2199, 4294901760
    %2201 = vmatmul.mubr.f32.gmra.mrb[0].mxu0 %v2200
    %v2202 = vpop.f32.mrb[0].mxu0
    %v2203 = vadd.f32 %v2128, %v2202
    %v2204 = vpop.f32.mrb[0].mxu0
    %2205 = vdwg.mxu0
    %2206 = vmatprep.subr.mxu0 0.0
    %v2207 = vand.u32 %v1884, 4294901760
    %v2208 = vsub.f32 %v1884, %v2207
    %v2209 = vand.u32 %v2208, 4294901760
    %2210 = vmatpush1.msra.mxu0 %v2209
    %2211 = vmatprep.subr.mxu0 0.0
    %v2212 = vand.u32 %v1886, 4294901760
    %v2213 = vsub.f32 %v1886, %v2212
    %v2214 = vand.u32 %v2213, 4294901760
    %2215 = vmatpush1.msra.mxu0 %v2214
    %2216 = vmatprep.subr.mxu0 0.0
    %2217 = vmatpush1.msra.mxu0 0.0
    %2218 = vmatprep.subr.mxu0 0.0
    %2219 = vmatpush1.msra.mxu0 0.0
    %2220 = vmatprep.subr.mxu0 0.0
    %2221 = vmatpush1.msra.mxu0 0.0
    %2222 = vmatprep.subr.mxu0 0.0
    %2223 = vmatpush1.msra.mxu0 0.0
    %2224 = vmatprep.subr.mxu0 0.0
    %2225 = vmatpush1.msra.mxu0 0.0
    %2226 = vmatprep.subr.mxu0 0.0
    %2227 = vmatpush1.msra.mxu0 0.0
    %2228 = vmatprep.subr.mxu0 0.0
    %2229 = vmatpush1.msra.mxu0 0.0
    %2230 = vmatprep.subr.mxu0 0.0
    %2231 = vmatpush1.msra.mxu0 0.0
    %2232 = vmatprep.subr.mxu0 0.0
    %2233 = vmatpush1.msra.mxu0 0.0
    %2234 = vmatprep.subr.mxu0 0.0
    %2235 = vmatpush1.msra.mxu0 0.0
    %2236 = vmatprep.subr.mxu0 0.0
    %2237 = vmatpush1.msra.mxu0 0.0
    %2238 = vmatprep.subr.mxu0 0.0
    %2239 = vmatpush1.msra.mxu0 0.0
    %2240 = vmatprep.subr.mxu0 0.0
    %2241 = vmatpush1.msra.mxu0 0.0
    %2242 = vmatprep.subr.mxu0 0.0
    %2243 = vmatpush1.msra.mxu0 0.0
    %2244 = vmatprep.subr.mxu0 0.0
    %2245 = vmatpush1.msra.mxu0 0.0
    %2246 = vmatprep.subr.mxu0 0.0
    %2247 = vmatpush1.msra.mxu0 0.0
    %2248 = vmatprep.subr.mxu0 0.0
    %2249 = vmatpush1.msra.mxu0 0.0
    %2250 = vmatprep.subr.mxu0 0.0
    %2251 = vmatpush1.msra.mxu0 0.0
    %2252 = vmatprep.subr.mxu0 0.0
    %2253 = vmatpush1.msra.mxu0 0.0
    %2254 = vmatprep.subr.mxu0 0.0
    %2255 = vmatpush1.msra.mxu0 0.0
    %2256 = vmatprep.subr.mxu0 0.0
    %2257 = vmatpush1.msra.mxu0 0.0
    %2258 = vmatprep.subr.mxu0 0.0
    %2259 = vmatpush1.msra.mxu0 0.0
    %2260 = vmatprep.subr.mxu0 0.0
    %2261 = vmatpush1.msra.mxu0 0.0
    %2262 = vmatprep.subr.mxu0 0.0
    %2263 = vmatpush1.msra.mxu0 0.0
    %2264 = vmatprep.subr.mxu0 0.0
    %2265 = vmatpush1.msra.mxu0 0.0
    %2266 = vmatprep.subr.mxu0 0.0
    %2267 = vmatpush1.msra.mxu0 0.0
    %2268 = vmatprep.subr.mxu0 0.0
    %2269 = vmatpush1.msra.mxu0 0.0
    %2270 = vmatprep.subr.mxu0 0.0
    %2271 = vmatpush1.msra.mxu0 0.0
    %2272 = vmatprep.subr.mxu0 0.0
    %2273 = vmatpush1.msra.mxu0 0.0
    %2274 = vmatprep.subr.mxu0 0.0
    %2275 = vmatpush1.msra.mxu0 0.0
    %2276 = vmatprep.mubr.f32.mxu0 0.0
    %v2277 = vand.u32 %v1895, 4294901760
    %2278 = vmatmul.mubr.f32.gmra.mrb[0].mxu0 %v2277
    %v2279 = vpop.f32.mrb[0].mxu0
    %v2280 = vadd.f32 %v2203, %v2279
    %v2281 = vpop.f32.mrb[0].mxu0
    %2282 = vdwg.mxu0
    %2283 = vmatprep.subr.mxu0 0.0
    %v2284 = vand.u32 %v1884, 4294901760
    %2285 = vmatpush1.msra.mxu0 %v2284
    %2286 = vmatprep.subr.mxu0 0.0
    %v2287 = vand.u32 %v1886, 4294901760
    %2288 = vmatpush1.msra.mxu0 %v2287
    %2289 = vmatprep.subr.mxu0 0.0
    %2290 = vmatpush1.msra.mxu0 0.0
    %2291 = vmatprep.subr.mxu0 0.0
    %2292 = vmatpush1.msra.mxu0 0.0
    %2293 = vmatprep.subr.mxu0 0.0
    %2294 = vmatpush1.msra.mxu0 0.0
    %2295 = vmatprep.subr.mxu0 0.0
    %2296 = vmatpush1.msra.mxu0 0.0
    %2297 = vmatprep.subr.mxu0 0.0
    %2298 = vmatpush1.msra.mxu0 0.0
    %2299 = vmatprep.subr.mxu0 0.0
    %2300 = vmatpush1.msra.mxu0 0.0
    %2301 = vmatprep.subr.mxu0 0.0
    %2302 = vmatpush1.msra.mxu0 0.0
    %2303 = vmatprep.subr.mxu0 0.0
    %2304 = vmatpush1.msra.mxu0 0.0
    %2305 = vmatprep.subr.mxu0 0.0
    %2306 = vmatpush1.msra.mxu0 0.0
    %2307 = vmatprep.subr.mxu0 0.0
    %2308 = vmatpush1.msra.mxu0 0.0
    %2309 = vmatprep.subr.mxu0 0.0
    %2310 = vmatpush1.msra.mxu0 0.0
    %2311 = vmatprep.subr.mxu0 0.0
    %2312 = vmatpush1.msra.mxu0 0.0
    %2313 = vmatprep.subr.mxu0 0.0
    %2314 = vmatpush1.msra.mxu0 0.0
    %2315 = vmatprep.subr.mxu0 0.0
    %2316 = vmatpush1.msra.mxu0 0.0
    %2317 = vmatprep.subr.mxu0 0.0
    %2318 = vmatpush1.msra.mxu0 0.0
    %2319 = vmatprep.subr.mxu0 0.0
    %2320 = vmatpush1.msra.mxu0 0.0
    %2321 = vmatprep.subr.mxu0 0.0
    %2322 = vmatpush1.msra.mxu0 0.0
    %2323 = vmatprep.subr.mxu0 0.0
    %2324 = vmatpush1.msra.mxu0 0.0
    %2325 = vmatprep.subr.mxu0 0.0
    %2326 = vmatpush1.msra.mxu0 0.0
    %2327 = vmatprep.subr.mxu0 0.0
    %2328 = vmatpush1.msra.mxu0 0.0
    %2329 = vmatprep.subr.mxu0 0.0
    %2330 = vmatpush1.msra.mxu0 0.0
    %2331 = vmatprep.subr.mxu0 0.0
    %2332 = vmatpush1.msra.mxu0 0.0
    %2333 = vmatprep.subr.mxu0 0.0
    %2334 = vmatpush1.msra.mxu0 0.0
    %2335 = vmatprep.subr.mxu0 0.0
    %2336 = vmatpush1.msra.mxu0 0.0
    %2337 = vmatprep.subr.mxu0 0.0
    %2338 = vmatpush1.msra.mxu0 0.0
    %2339 = vmatprep.subr.mxu0 0.0
    %2340 = vmatpush1.msra.mxu0 0.0
    %2341 = vmatprep.subr.mxu0 0.0
    %2342 = vmatpush1.msra.mxu0 0.0
    %2343 = vmatprep.subr.mxu0 0.0
    %2344 = vmatpush1.msra.mxu0 0.0
    %2345 = vmatprep.subr.mxu0 0.0
    %2346 = vmatpush1.msra.mxu0 0.0
    %2347 = vmatprep.subr.mxu0 0.0
    %2348 = vmatpush1.msra.mxu0 0.0
    %2349 = vmatprep.mubr.f32.mxu0 0.0
    %v2350 = vand.u32 %v1895, 4294901760
    %2351 = vmatmul.mubr.f32.gmra.mrb[0].mxu0 %v2350
    %v2352 = vpop.f32.mrb[0].mxu0
    %v2353 = vadd.f32 %v2280, %v2352
    %v2354 = vpop.f32.mrb[0].mxu0
    %2355 = vdwg.mxu0
    %2356 = vst [vmem:[#allocation2] sm:$0xff] %v2353
    // Predicated region
    $region38: #{tpu_custom_call.1} parent=1 // pred_check
      _
    $region39: #{tpu_custom_call.1} parent=1 // pred_check_branch
      %2358 = sbr.rel (0) target = $region41
    $region40: #{tpu_custom_call.1} parent=1 // pred_region
      %s2360 = ssub.s32 128, 128
      %2361 = vsyncadd [#allocation3], %s2360
      %s2363 = sshll.u32 [#allocation2], 4
      %s2364 = int_to_ptr.vmem [resolvable:$true] %s2363
      %2366 = dma.vmem_to_hbm [thread:$0]  %s2364, 128, %s9, [#allocation3]
    $region41: #{tpu_custom_call.1} parent=1 // pred_fallthru
      _
    // Predicated region
    $region42: #{tpu_custom_call.1} parent=1 // pred_check
      _
    $region43: #{tpu_custom_call.1} parent=1 // pred_check_branch
      %2368 = sbr.rel (0) target = $region45
    $region44: #{tpu_custom_call.1} parent=1 // pred_region
      %2369 = dma.done [#allocation3], 128
    $region45: #{tpu_custom_call.1} parent=1 // pred_fallthru
      _
    %2370 = vsyncpa [#allocation3], 1

</llo_original>
